<compile_context>
chip_gen: v6e
topology: v6e:2x2x1
jax: 0.10.0
libtpu: 0.0.40
codegen_flags: <defaults>
</compile_context>

<pallas_src>
import jax
import jax.numpy as jnp
from jax.experimental import pallas as pl
from jax.experimental.pallas import tpu as pltpu

TOTAL_SIZE = 1024   # module: totalSize = 11397 (scaled down, multiple of 256)
P1 = 256            # module: self.p1 = 512    (scaled down, multiple of 128)
STFT_SIZE = 67      # module: self.stftSize = 67 (kept; lane-padded to 128)
STFT_PAD = 128      # lane-padded istft width
TN = 256            # streamed tile: layer-1 output cols == layer-2 contraction rows
B_ROWS = 8          # MXU row padding; row 0 carries the real (batch=1) sample


def fused_timefreq_kernel(x_ref, istft_ref,
                          w1_ref, s1_ref, b1_ref,
                          w2_ref, s2_ref, b2_ref,
                          w3_ref, s3_ref, b3_ref,
                          wl3_ref, wli_ref, bl_ref,
                          o_ref, acc_ref):
    """One grid step = one 256-wide slice of layer-1 output / layer-2 contraction.

    acc_ref persists across grid steps and holds layer-2's f32 pre-activation.
    Layers 3 + linearLast run only on the last step (weights already resident).
    """
    n = pl.program_id(0)

    @pl.when(n == 0)
    def _init():
        acc_ref[...] = jnp.zeros_like(acc_ref)

    # layer 1, output-column tile n:  relu((x @ W1q[:, tile]) * s1 + b1)
    # int8 weight tile -> bf16 on-chip; f32 accumulate; per-column dequant scale
    # folded into the bias add.
    l1_n = jnp.maximum(
        jnp.dot(x_ref[...], w1_ref[...].astype(jnp.bfloat16),
                preferred_element_type=jnp.float32) * s1_ref[...] + b1_ref[...],
        0.0)

    # layer 2, partial contraction with the matching row tile of W2q:
    #   acc += l1[:, tile] @ W2q[tile, :]
    acc_ref[...] += jnp.dot(l1_n.astype(jnp.bfloat16),
                            w2_ref[...].astype(jnp.bfloat16),
                            preferred_element_type=jnp.float32)

    @pl.when(n == pl.num_programs(0) - 1)
    def _finalize():
        # layer 2 epilogue: per-column dequant scale + bias + ReLU
        l2 = jnp.maximum(acc_ref[...] * s2_ref[...] + b2_ref[...], 0.0)
        # layer 3: relu((l2 @ W3q) * s3 + b3)
        l3 = jnp.maximum(
            jnp.dot(l2.astype(jnp.bfloat16), w3_ref[...].astype(jnp.bfloat16),
                    preferred_element_type=jnp.float32) * s3_ref[...] + b3_ref[...],
            0.0)
        # linearLast on concat([l3, istft]) as two VPU dot-products (lane reduce).
        # Padded istft lanes carry zero weights, so they contribute nothing.
        s = (jnp.sum(l3 * wl3_ref[...], axis=-1, keepdims=True)
             + jnp.sum(istft_ref[...] * wli_ref[...], axis=-1, keepdims=True)
             + bl_ref[...])
        o_ref[...] = jnp.maximum(s, 0.0)


def fused_forward(x_rows_bf16, istft_pad, p):
    """x_rows_bf16: (B_ROWS, TOTAL_SIZE) bf16, istft_pad: (1, STFT_PAD) f32
    -> (B_ROWS, 1) f32 (row 0 is the real output)."""
    n_steps = TOTAL_SIZE // TN

    def const(shape):
        # Constant block index: fetched once (iteration-0 prologue), reused after.
        return pl.BlockSpec(shape, lambda n: (0, 0))

    grid_spec = pltpu.PrefetchScalarGridSpec(
        num_scalar_prefetch=0,
        grid=(n_steps,),
        in_specs=[
            const((B_ROWS, TOTAL_SIZE)),                         # x (bf16)
            const((1, STFT_PAD)),                                # istft (f32, padded)
            pl.BlockSpec((TOTAL_SIZE, TN), lambda n: (0, n)),    # W1q column tile (int8, streamed)
            pl.BlockSpec((1, TN), lambda n: (0, n)),             # s1 tile (f32)
            pl.BlockSpec((1, TN), lambda n: (0, n)),             # b1 tile (f32)
            pl.BlockSpec((TN, TOTAL_SIZE), lambda n: (n, 0)),    # W2q row tile (int8, streamed)
            const((1, TOTAL_SIZE)),                              # s2 (f32)
            const((1, TOTAL_SIZE)),                              # b2 (f32)
            const((TOTAL_SIZE, P1)),                             # W3q (int8, fetched once)
            const((1, P1)),                                      # s3 (f32)
            const((1, P1)),                                      # b3 (f32)
            const((1, P1)),                                      # linearLast W, l3 part (f32)
            const((1, STFT_PAD)),                                # linearLast W, istft part (f32, padded)
            const((1, 1)),                                       # linearLast bias (f32)
        ],
        out_specs=pl.BlockSpec((B_ROWS, 1), lambda n: (0, 0)),
        scratch_shapes=[pltpu.VMEM((B_ROWS, TOTAL_SIZE), jnp.float32)],  # layer-2 accumulator
    )

    return pl.pallas_call(
        fused_timefreq_kernel,
        out_shape=jax.ShapeDtypeStruct((B_ROWS, 1), jnp.float32),
        grid_spec=grid_spec,
        compiler_params=pltpu.CompilerParams(
            # Accumulator carried across the grid axis -> must be "arbitrary".
            dimension_semantics=("arbitrary",),
            # Per-step footprint is ~1.6 MiB (double-buffered 256 KiB int8 tiles
            # + constants); 32 MiB is a comfortable, generation-portable limit.
            # W3q could additionally use pipeline_mode=pl.Buffered(1) (constant
            # block) to reclaim its second buffer, but it is not needed to fit.
            vmem_limit_bytes=32 * 1024 * 1024,
        ),
    )(x_rows_bf16, istft_pad,
      p["w1q"], p["s1"], p["b1"],
      p["w2q"], p["s2"], p["b2"],
      p["w3q"], p["s3"], p["b3"],
      p["wl3"], p["wli"], p["bl"])


def init_linear_params(key, fan_in, fan_out):
    # PyTorch nn.Linear default init: U(-1/sqrt(fan_in), 1/sqrt(fan_in)).
    kw, kb = jax.random.split(key)
    bound = 1.0 / jnp.sqrt(jnp.float32(fan_in))
    w = jax.random.uniform(kw, (fan_in, fan_out), jnp.float32, -bound, bound)
    b = jax.random.uniform(kb, (1, fan_out), jnp.float32, -bound, bound)
    return w, b


def init_params(key):
    k1, k2, k3, k4 = jax.random.split(key, 4)
    return {
        "linear1": init_linear_params(k1, TOTAL_SIZE, TOTAL_SIZE),
        "linear2": init_linear_params(k2, TOTAL_SIZE, TOTAL_SIZE),
        "linear3": init_linear_params(k3, TOTAL_SIZE, P1),
        "linearLast": init_linear_params(k4, P1 + STFT_SIZE, 1),
    }


def quantize_per_column(w):
    """Symmetric per-output-column int8 quantization: w ≈ q * scale."""
    amax = jnp.max(jnp.abs(w), axis=0, keepdims=True)            # (1, N)
    scale = jnp.maximum(amax, 1e-12) / 127.0
    q = jnp.clip(jnp.round(w / scale), -127.0, 127.0).astype(jnp.int8)
    return q, scale.astype(jnp.float32)


def prepare_params(params):
    """One-time prep (outside jit): int8-quantize W1/W2/W3, split/pad linearLast."""
    w1, b1 = params["linear1"]
    w2, b2 = params["linear2"]
    w3, b3 = params["linear3"]
    wl, bl = params["linearLast"]
    w1q, s1 = quantize_per_column(w1)
    w2q, s2 = quantize_per_column(w2)
    w3q, s3 = quantize_per_column(w3)
    wl3 = wl[:P1, 0].reshape(1, P1)                                   # (1, P1) f32
    wli = jnp.zeros((1, STFT_PAD), jnp.float32).at[0, :STFT_SIZE].set(wl[P1:, 0])
    return {
        "w1q": w1q, "s1": s1, "b1": b1,
        "w2q": w2q, "s2": s2, "b2": b2,
        "w3q": w3q, "s3": s3, "b3": b3,
        "wl3": wl3, "wli": wli, "bl": bl,                             # bl: (1, 1) f32
    }


@jax.jit
def time_freq_net_forward(kparams, x, istft_vec):
    """x: (TOTAL_SIZE,), istft_vec: (STFT_SIZE,) -> out: (1,)"""
    # TODO(synk): torch.istft(torch.tensor(a), n_fft=nperseg, ...) in the module references undefined globals `a`/`nperseg` (and its arg combo is invalid in torch); we take the istft result as a precomputed real vector of length STFT_SIZE instead of reimplementing istft.
    x_rows = jnp.zeros((B_ROWS, TOTAL_SIZE), jnp.bfloat16).at[0].set(
        x.astype(jnp.bfloat16))                                       # pre-cast to bf16
    istft_pad = jnp.zeros((1, STFT_PAD), jnp.float32).at[0, :STFT_SIZE].set(istft_vec)
    out = fused_forward(x_rows, istft_pad, kparams)                   # (B_ROWS, 1)
    return out[0]                                                     # (1,)


def reference_forward(kparams, x, istft_vec):
    """Plain-JAX reference mirroring the kernel's numerics exactly
    (int8 weights dequantized as bf16-operand matmuls, f32 accumulation,
    per-column scale folded into the bias, f32 last layer)."""
    def qlin(wq, s, b, v_bf16):
        y = jnp.dot(v_bf16, wq.astype(jnp.bfloat16),
                    preferred_element_type=jnp.float32) * s + b
        return jnp.maximum(y, 0.0)

    l1 = qlin(kparams["w1q"], kparams["s1"], kparams["b1"],
              x.reshape(1, TOTAL_SIZE).astype(jnp.bfloat16))
    l2 = qlin(kparams["w2q"], kparams["s2"], kparams["b2"], l1.astype(jnp.bfloat16))
    l3 = qlin(kparams["w3q"], kparams["s3"], kparams["b3"], l2.astype(jnp.bfloat16))
    s = (jnp.sum(l3 * kparams["wl3"])
         + jnp.sum(istft_vec * kparams["wli"][0, :STFT_SIZE])
         + kparams["bl"][0, 0])
    return jnp.maximum(s, 0.0).reshape(1)


if __name__ == "__main__":
    key = jax.random.PRNGKey(0)
    kp, kx, ki = jax.random.split(key, 3)
    params = init_params(kp)
    kparams = prepare_params(params)
    x = jax.random.normal(kx, (TOTAL_SIZE,), jnp.float32)
    istft_vec = jax.random.normal(ki, (STFT_SIZE,), jnp.float32)

    out = time_freq_net_forward(kparams, x, istft_vec)
    out = jax.block_until_ready(out)
    assert out.shape == (1,)

    ref = reference_forward(kparams, x, istft_vec)
    assert jnp.allclose(out, ref, rtol=2e-2, atol=2e-2), (out, ref)

    print("KERNEL_OK")
</pallas_src>

<mosaic_0001>
module attributes {stable_mosaic.version = 11 : i64} {
  func.func @fused_timefreq_kernel(%arg0: i32, %arg1: memref<8x1024xbf16, #tpu.memory_space<vmem>>, %arg2: memref<1x128xf32, #tpu.memory_space<vmem>>, %arg3: memref<1024x256xi8, #tpu.memory_space<vmem>>, %arg4: memref<1x256xf32, #tpu.memory_space<vmem>>, %arg5: memref<1x256xf32, #tpu.memory_space<vmem>>, %arg6: memref<256x1024xi8, #tpu.memory_space<vmem>>, %arg7: memref<1x1024xf32, #tpu.memory_space<vmem>>, %arg8: memref<1x1024xf32, #tpu.memory_space<vmem>>, %arg9: memref<1024x256xi8, #tpu.memory_space<vmem>>, %arg10: memref<1x256xf32, #tpu.memory_space<vmem>>, %arg11: memref<1x256xf32, #tpu.memory_space<vmem>>, %arg12: memref<1x256xf32, #tpu.memory_space<vmem>>, %arg13: memref<1x128xf32, #tpu.memory_space<vmem>>, %arg14: memref<1x1xf32, #tpu.memory_space<vmem>>, %arg15: memref<8x1xf32, #tpu.memory_space<vmem>>, %arg16: memref<8x1024xf32, #tpu.memory_space<vmem>>) attributes {dimension_semantics = [#tpu.dimension_semantics<arbitrary>], iteration_bounds = array<i64: 4>, scalar_prefetch = 0 : i64, scratch_operands = 1 : i64, tpu.core_type = #tpu.core_type<tc>, window_params = [{pipeline_mode = #tpu.pipeline_mode<synchronous>, transform_indices = @transform_0, window_bounds = array<i64: 8, 1024>}, {pipeline_mode = #tpu.pipeline_mode<synchronous>, transform_indices = @transform_1, window_bounds = array<i64: 1, 128>}, {transform_indices = @transform_2, window_bounds = array<i64: 1024, 256>}, {transform_indices = @transform_3, window_bounds = array<i64: 1, 256>}, {transform_indices = @transform_4, window_bounds = array<i64: 1, 256>}, {transform_indices = @transform_5, window_bounds = array<i64: 256, 1024>}, {pipeline_mode = #tpu.pipeline_mode<synchronous>, transform_indices = @transform_6, window_bounds = array<i64: 1, 1024>}, {pipeline_mode = #tpu.pipeline_mode<synchronous>, transform_indices = @transform_7, window_bounds = array<i64: 1, 1024>}, {pipeline_mode = #tpu.pipeline_mode<synchronous>, transform_indices = @transform_8, window_bounds = array<i64: 1024, 256>}, {pipeline_mode = #tpu.pipeline_mode<synchronous>, transform_indices = @transform_9, window_bounds = array<i64: 1, 256>}, {pipeline_mode = #tpu.pipeline_mode<synchronous>, transform_indices = @transform_10, window_bounds = array<i64: 1, 256>}, {pipeline_mode = #tpu.pipeline_mode<synchronous>, transform_indices = @transform_11, window_bounds = array<i64: 1, 256>}, {pipeline_mode = #tpu.pipeline_mode<synchronous>, transform_indices = @transform_12, window_bounds = array<i64: 1, 128>}, {pipeline_mode = #tpu.pipeline_mode<synchronous>, transform_indices = @transform_13, window_bounds = array<i64: 1, 1>}, {pipeline_mode = #tpu.pipeline_mode<synchronous>, transform_indices = @transform_14, window_bounds = array<i64: 8, 1>}]} {
    %c0_i32 = arith.constant 0 : i32
    %0 = arith.cmpi eq, %arg0, %c0_i32 : i32
    %1 = arith.extui %0 : i1 to i32
    %c0_i32_0 = arith.constant 0 : i32
    %2 = arith.cmpi ne, %1, %c0_i32_0 : i32
    scf.if %2 {
      %cst_17 = arith.constant 0.000000e+00 : f32
      %25 = vector.broadcast %cst_17 : f32 to vector<8x1024xf32>
      %c0_18 = arith.constant 0 : index
      %c0_19 = arith.constant 0 : index
      %26 = vector.load %arg16[%c0_18, %c0_19] : memref<8x1024xf32, #tpu.memory_space<vmem>>, vector<8x1024xf32>
      tpu.vector_store %arg16[%c0_18, %c0_19], %25 {strides = array<i32>} : memref<8x1024xf32, #tpu.memory_space<vmem>>, vector<8x1024xf32>,
    } else {
    }
    %c0 = arith.constant 0 : index
    %c0_1 = arith.constant 0 : index
    %3 = vector.load %arg1[%c0, %c0_1] : memref<8x1024xbf16, #tpu.memory_space<vmem>>, vector<8x1024xbf16>
    %c0_2 = arith.constant 0 : index
    %c0_3 = arith.constant 0 : index
    %4 = vector.load %arg3[%c0_2, %c0_3] : memref<1024x256xi8, #tpu.memory_space<vmem>>, vector<1024x256xi8>
    %5 = arith.sitofp %4 : vector<1024x256xi8> to vector<1024x256xbf16>
    %cst = arith.constant dense<0.000000e+00> : vector<8x256xf32>
    %6 = tpu.matmul %3, %5, %cst {dimension_numbers = #tpu.dot_dimension_numbers<[1], [0], [0], [1], [0, 0, 1, 1], [], []>} : vector<8x1024xbf16>, vector<1024x256xbf16>, vector<8x256xf32> -> vector<8x256xf32>
    %c0_4 = arith.constant 0 : index
    %c0_5 = arith.constant 0 : index
    %7 = vector.load %arg4[%c0_4, %c0_5] : memref<1x256xf32, #tpu.memory_space<vmem>>, vector<1x256xf32>
    %8 = vector.broadcast %7 : vector<1x256xf32> to vector<8x256xf32>
    %9 = arith.mulf %6, %8 : vector<8x256xf32>
    %c0_6 = arith.constant 0 : index
    %c0_7 = arith.constant 0 : index
    %10 = vector.load %arg5[%c0_6, %c0_7] : memref<1x256xf32, #tpu.memory_space<vmem>>, vector<1x256xf32>
    %11 = vector.broadcast %10 : vector<1x256xf32> to vector<8x256xf32>
    %12 = arith.addf %9, %11 : vector<8x256xf32>
    %cst_8 = arith.constant 0.000000e+00 : f32
    %13 = vector.broadcast %cst_8 : f32 to vector<8x256xf32>
    %14 = arith.maximumf %12, %13 : vector<8x256xf32>
    %c0_9 = arith.constant 0 : index
    %c0_10 = arith.constant 0 : index
    %15 = vector.load %arg16[%c0_9, %c0_10] : memref<8x1024xf32, #tpu.memory_space<vmem>>, vector<8x1024xf32>
    %16 = arith.truncf %14 : vector<8x256xf32> to vector<8x256xbf16>
    %c0_11 = arith.constant 0 : index
    %c0_12 = arith.constant 0 : index
    %17 = vector.load %arg6[%c0_11, %c0_12] : memref<256x1024xi8, #tpu.memory_space<vmem>>, vector<256x1024xi8>
    %18 = arith.sitofp %17 : vector<256x1024xi8> to vector<256x1024xbf16>
    %cst_13 = arith.constant dense<0.000000e+00> : vector<8x1024xf32>
    %19 = tpu.matmul %16, %18, %cst_13 {dimension_numbers = #tpu.dot_dimension_numbers<[1], [0], [0], [1], [0, 0, 1, 1], [], []>} : vector<8x256xbf16>, vector<256x1024xbf16>, vector<8x1024xf32> -> vector<8x1024xf32>
    %20 = arith.addf %15, %19 : vector<8x1024xf32>
    %c0_14 = arith.constant 0 : index
    %c0_15 = arith.constant 0 : index
    %21 = vector.load %arg16[%c0_14, %c0_15] : memref<8x1024xf32, #tpu.memory_space<vmem>>, vector<8x1024xf32>
    tpu.vector_store %arg16[%c0_14, %c0_15], %20 {strides = array<i32>} : memref<8x1024xf32, #tpu.memory_space<vmem>>, vector<8x1024xf32>,
    %c3_i32 = arith.constant 3 : i32
    %22 = arith.cmpi eq, %arg0, %c3_i32 : i32
    %23 = arith.extui %22 : i1 to i32
    %c0_i32_16 = arith.constant 0 : i32
    %24 = arith.cmpi ne, %23, %c0_i32_16 : i32
    scf.if %24 {
      %c0_17 = arith.constant 0 : index
      %c0_18 = arith.constant 0 : index
      %25 = vector.load %arg16[%c0_17, %c0_18] : memref<8x1024xf32, #tpu.memory_space<vmem>>, vector<8x1024xf32>
      %c0_19 = arith.constant 0 : index
      %c0_20 = arith.constant 0 : index
      %26 = vector.load %arg7[%c0_19, %c0_20] : memref<1x1024xf32, #tpu.memory_space<vmem>>, vector<1x1024xf32>
      %27 = vector.broadcast %26 : vector<1x1024xf32> to vector<8x1024xf32>
      %28 = arith.mulf %25, %27 : vector<8x1024xf32>
      %c0_21 = arith.constant 0 : index
      %c0_22 = arith.constant 0 : index
      %29 = vector.load %arg8[%c0_21, %c0_22] : memref<1x1024xf32, #tpu.memory_space<vmem>>, vector<1x1024xf32>
      %30 = vector.broadcast %29 : vector<1x1024xf32> to vector<8x1024xf32>
      %31 = arith.addf %28, %30 : vector<8x1024xf32>
      %cst_23 = arith.constant 0.000000e+00 : f32
      %32 = vector.broadcast %cst_23 : f32 to vector<8x1024xf32>
      %33 = arith.maximumf %31, %32 : vector<8x1024xf32>
      %34 = arith.truncf %33 : vector<8x1024xf32> to vector<8x1024xbf16>
      %c0_24 = arith.constant 0 : index
      %c0_25 = arith.constant 0 : index
      %35 = vector.load %arg9[%c0_24, %c0_25] : memref<1024x256xi8, #tpu.memory_space<vmem>>, vector<1024x256xi8>
      %36 = arith.sitofp %35 : vector<1024x256xi8> to vector<1024x256xbf16>
      %cst_26 = arith.constant dense<0.000000e+00> : vector<8x256xf32>
      %37 = tpu.matmul %34, %36, %cst_26 {dimension_numbers = #tpu.dot_dimension_numbers<[1], [0], [0], [1], [0, 0, 1, 1], [], []>} : vector<8x1024xbf16>, vector<1024x256xbf16>, vector<8x256xf32> -> vector<8x256xf32>
      %c0_27 = arith.constant 0 : index
      %c0_28 = arith.constant 0 : index
      %38 = vector.load %arg10[%c0_27, %c0_28] : memref<1x256xf32, #tpu.memory_space<vmem>>, vector<1x256xf32>
      %39 = vector.broadcast %38 : vector<1x256xf32> to vector<8x256xf32>
      %40 = arith.mulf %37, %39 : vector<8x256xf32>
      %c0_29 = arith.constant 0 : index
      %c0_30 = arith.constant 0 : index
      %41 = vector.load %arg11[%c0_29, %c0_30] : memref<1x256xf32, #tpu.memory_space<vmem>>, vector<1x256xf32>
      %42 = vector.broadcast %41 : vector<1x256xf32> to vector<8x256xf32>
      %43 = arith.addf %40, %42 : vector<8x256xf32>
      %cst_31 = arith.constant 0.000000e+00 : f32
      %44 = vector.broadcast %cst_31 : f32 to vector<8x256xf32>
      %45 = arith.maximumf %43, %44 : vector<8x256xf32>
      %c0_32 = arith.constant 0 : index
      %c0_33 = arith.constant 0 : index
      %46 = vector.load %arg12[%c0_32, %c0_33] : memref<1x256xf32, #tpu.memory_space<vmem>>, vector<1x256xf32>
      %47 = vector.broadcast %46 : vector<1x256xf32> to vector<8x256xf32>
      %48 = arith.mulf %45, %47 : vector<8x256xf32>
      %cst_34 = arith.constant dense<0.000000e+00> : vector<8xf32>
      %49 = vector.multi_reduction <add>, %48, %cst_34 [1] : vector<8x256xf32> to vector<8xf32>
      %50 = vector.shape_cast %49 : vector<8xf32> to vector<8x1xf32>
      %c0_35 = arith.constant 0 : index
      %c0_36 = arith.constant 0 : index
      %51 = vector.load %arg2[%c0_35, %c0_36] : memref<1x128xf32, #tpu.memory_space<vmem>>, vector<1x128xf32>
      %c0_37 = arith.constant 0 : index
      %c0_38 = arith.constant 0 : index
      %52 = vector.load %arg13[%c0_37, %c0_38] : memref<1x128xf32, #tpu.memory_space<vmem>>, vector<1x128xf32>
      %53 = arith.mulf %51, %52 : vector<1x128xf32>
      %cst_39 = arith.constant dense<0.000000e+00> : vector<1xf32>
      %54 = vector.multi_reduction <add>, %53, %cst_39 [1] : vector<1x128xf32> to vector<1xf32>
      %55 = vector.shape_cast %54 : vector<1xf32> to vector<1x1xf32>
      %56 = vector.broadcast %55 : vector<1x1xf32> to vector<8x1xf32>
      %57 = arith.addf %50, %56 : vector<8x1xf32>
      %c0_40 = arith.constant 0 : index
      %c0_41 = arith.constant 0 : index
      %58 = vector.load %arg14[%c0_40, %c0_41] : memref<1x1xf32, #tpu.memory_space<vmem>>, vector<1x1xf32>
      %59 = vector.broadcast %58 : vector<1x1xf32> to vector<8x1xf32>
      %60 = arith.addf %57, %59 : vector<8x1xf32>
      %cst_42 = arith.constant 0.000000e+00 : f32
      %61 = vector.broadcast %cst_42 : f32 to vector<8x1xf32>
      %62 = arith.maximumf %60, %61 : vector<8x1xf32>
      %c0_43 = arith.constant 0 : index
      %c0_44 = arith.constant 0 : index
      %63 = vector.load %arg15[%c0_43, %c0_44] : memref<8x1xf32, #tpu.memory_space<vmem>>, vector<8x1xf32>
      tpu.vector_store %arg15[%c0_43, %c0_44], %62 {strides = array<i32>} : memref<8x1xf32, #tpu.memory_space<vmem>>, vector<8x1xf32>,
    } else {
    }
    return
  }
  func.func @transform_0(%arg0: i32) -> (i32, i32) {
    %c0_i32 = arith.constant 0 : i32
    %c0_i32_0 = arith.constant 0 : i32
    %c0_i32_1 = arith.constant 0 : i32
    return %c0_i32, %c0_i32_0 : i32, i32
  }
  func.func @transform_1(%arg0: i32) -> (i32, i32) {
    %c0_i32 = arith.constant 0 : i32
    %c0_i32_0 = arith.constant 0 : i32
    %c0_i32_1 = arith.constant 0 : i32
    return %c0_i32, %c0_i32_0 : i32, i32
  }
  func.func @transform_2(%arg0: i32) -> (i32, i32) {
    %c0_i32 = arith.constant 0 : i32
    %c0_i32_0 = arith.constant 0 : i32
    return %c0_i32, %arg0 : i32, i32
  }
  func.func @transform_3(%arg0: i32) -> (i32, i32) {
    %c0_i32 = arith.constant 0 : i32
    %c0_i32_0 = arith.constant 0 : i32
    return %c0_i32, %arg0 : i32, i32
  }
  func.func @transform_4(%arg0: i32) -> (i32, i32) {
    %c0_i32 = arith.constant 0 : i32
    %c0_i32_0 = arith.constant 0 : i32
    return %c0_i32, %arg0 : i32, i32
  }
  func.func @transform_5(%arg0: i32) -> (i32, i32) {
    %c0_i32 = arith.constant 0 : i32
    %c0_i32_0 = arith.constant 0 : i32
    return %arg0, %c0_i32 : i32, i32
  }
  func.func @transform_6(%arg0: i32) -> (i32, i32) {
    %c0_i32 = arith.constant 0 : i32
    %c0_i32_0 = arith.constant 0 : i32
    %c0_i32_1 = arith.constant 0 : i32
    return %c0_i32, %c0_i32_0 : i32, i32
  }
  func.func @transform_7(%arg0: i32) -> (i32, i32) {
    %c0_i32 = arith.constant 0 : i32
    %c0_i32_0 = arith.constant 0 : i32
    %c0_i32_1 = arith.constant 0 : i32
    return %c0_i32, %c0_i32_0 : i32, i32
  }
  func.func @transform_8(%arg0: i32) -> (i32, i32) {
    %c0_i32 = arith.constant 0 : i32
    %c0_i32_0 = arith.constant 0 : i32
    %c0_i32_1 = arith.constant 0 : i32
    return %c0_i32, %c0_i32_0 : i32, i32
  }
  func.func @transform_9(%arg0: i32) -> (i32, i32) {
    %c0_i32 = arith.constant 0 : i32
    %c0_i32_0 = arith.constant 0 : i32
    %c0_i32_1 = arith.constant 0 : i32
    return %c0_i32, %c0_i32_0 : i32, i32
  }
  func.func @transform_10(%arg0: i32) -> (i32, i32) {
    %c0_i32 = arith.constant 0 : i32
    %c0_i32_0 = arith.constant 0 : i32
    %c0_i32_1 = arith.constant 0 : i32
    return %c0_i32, %c0_i32_0 : i32, i32
  }
  func.func @transform_11(%arg0: i32) -> (i32, i32) {
    %c0_i32 = arith.constant 0 : i32
    %c0_i32_0 = arith.constant 0 : i32
    %c0_i32_1 = arith.constant 0 : i32
    return %c0_i32, %c0_i32_0 : i32, i32
  }
  func.func @transform_12(%arg0: i32) -> (i32, i32) {
    %c0_i32 = arith.constant 0 : i32
    %c0_i32_0 = arith.constant 0 : i32
    %c0_i32_1 = arith.constant 0 : i32
    return %c0_i32, %c0_i32_0 : i32, i32
  }
  func.func @transform_13(%arg0: i32) -> (i32, i32) {
    %c0_i32 = arith.constant 0 : i32
    %c0_i32_0 = arith.constant 0 : i32
    %c0_i32_1 = arith.constant 0 : i32
    return %c0_i32, %c0_i32_0 : i32, i32
  }
  func.func @transform_14(%arg0: i32) -> (i32, i32) {
    %c0_i32 = arith.constant 0 : i32
    %c0_i32_0 = arith.constant 0 : i32
    %c0_i32_1 = arith.constant 0 : i32
    return %c0_i32, %c0_i32_0 : i32, i32
  }
}

</mosaic_0001>

<llo_original>
// kernel: time_freq_net_forward.1
$region0: #{time_freq_net_forward.1}
  #allocation0 [shape = 'u32[]', space=smem, size = 0x4, offset = 0x4, fixed_abs, tag = 'smem constant byte address 0x4 - core index']
  #allocation1 [shape = 'u32[144,128]{1,0:T(1,128)}', space=vmem, size = 0x12000, scoped, tag = 'internal scratch']
  #allocation2 [shape = 'f32[8,1024]{1,0:T(8,128)}', space=vmem, size = 0x8000, scoped, tag = 'scratch operand']
  #allocation3 [shape = 'f32[1,1]{1,0:T(1,128)S(1)}', space=vmem, size = 0x200, scoped, tag = 'scoped memory for time_freq_net_forward.1']
  %s0 = inlined_call_operand.vmem [shape: bf16[8,1024], index: 0, kind: input, shape index: {}]
  %s1 = inlined_call_operand.vmem [shape: f32[1,128], index: 1, kind: input, shape index: {}]
  %s2 = inlined_call_operand.hbm [shape: s8[1024,1024], index: 2, kind: input, shape index: {}]
  %s3 = inlined_call_operand.vmem [shape: f32[1,1024], index: 3, kind: input, shape index: {}]
  %s4 = inlined_call_operand.vmem [shape: f32[1,1024], index: 4, kind: input, shape index: {}]
  %s5 = inlined_call_operand.hbm [shape: s8[1024,1024], index: 5, kind: input, shape index: {}]
  %s6 = inlined_call_operand.vmem [shape: f32[1,1024], index: 6, kind: input, shape index: {}]
  %s7 = inlined_call_operand.vmem [shape: f32[1,1024], index: 7, kind: input, shape index: {}]
  %s8 = inlined_call_operand.hbm [shape: s8[1024,256], index: 8, kind: input, shape index: {}]
  %s9 = inlined_call_operand.vmem [shape: f32[1,256], index: 9, kind: input, shape index: {}]
  %s10 = inlined_call_operand.vmem [shape: f32[1,256], index: 10, kind: input, shape index: {}]
  %s11 = inlined_call_operand.vmem [shape: f32[1,256], index: 11, kind: input, shape index: {}]
  %s12 = inlined_call_operand.vmem [shape: f32[1,128], index: 12, kind: input, shape index: {}]
  %s13 = inlined_call_operand.<no memory space> [shape: f32[1,1], index: 13, kind: input, shape index: {}]
  %s14 = inlined_call_operand.vmem [shape: f32[8,1], index: 14, kind: output, shape index: {}]
  %s15 = sld [smem:[#allocation0]]
  $region109: #{time_freq_net_forward.1} parent=0
    _
  %s17 = ssub.s32 1, %s15
  %s18 = scalar_select 0, %s17, %s15
  %v19 = vstv %s13
  %20 = vst [vmem:[#allocation3] sm:$0x1] %v19
  $region1: #{time_freq_net_forward.1} parent=0
    #allocation4 [shape = 'u8[524288]{0}', space=vmem, size = 0x80000, scoped, tag = 'input window, operand 2']
    #allocation5 [shape = 's32[2]{0}', space=sflag, size = 0x8, scoped, tag = 'scoped memory for time_freq_net_forward.1']
    #allocation6 [shape = 'u8[524288]{0}', space=vmem, size = 0x80000, scoped, tag = 'input window, operand 5']
    #allocation7 [shape = 's32[2]{0}', space=sflag, size = 0x8, scoped, tag = 'scoped memory for time_freq_net_forward.1']
    #allocation8 [shape = 'u8[262144]{0}', space=vmem, size = 0x40000, scoped, tag = 'input window, operand 8, single buffered']
    %21 = vsyncpa [#allocation5], 0
    %s22 = scalar_lea.sflag [#allocation5], 1
    %23 = vsyncpa %s22, 0
    %24 = vsyncpa [#allocation7], 0
    %s25 = scalar_lea.sflag [#allocation7], 1
    %26 = vsyncpa %s25, 0
    loop: start=0, step=1, limit=6
    $region2: #{time_freq_net_forward.1} parent=1 // loop_pre_header
      _
    $region3: #{time_freq_net_forward.1} parent=1 // loop_header
      %s28 = sphi 0, %s32
      %p29 = scmp.ge.s32.totalorder %s28, 6
      %s36 = sphi 0, %s36
      %s38 = sphi 0, %s36
      %s39 = sphi 0, %s38
      %s53 = sphi 0, %s39
      %s57 = sphi 0, %s57
      %s59 = sphi 0, %s57
      %s60 = sphi 0, %s59
      %s74 = sphi 0, %s60
      %s80 = sphi 0, %s82
      %s83 = sphi 0, %s80
      %s84 = sphi 0, %s83
      %s100 = sphi 0, %s84
      %s106 = sphi 0, %s108
      %s109 = sphi 0, %s106
      %s110 = sphi 0, %s109
      %s126 = sphi 0, %s110
      %s132 = sphi 0, %s134
      %s135 = sphi 0, %s132
      %s136 = sphi 0, %s135
      %s152 = sphi 0, %s136
      %s158 = sphi 0, %s160
      %s161 = sphi 0, %s158
      %s162 = sphi 0, %s161
      %s178 = sphi 0, %s162
      %s182 = sphi 0, %s182
      %s184 = sphi 0, %s182
      %s185 = sphi 0, %s184
      %s199 = sphi 0, %s185
      %s203 = sphi 0, %s203
      %s205 = sphi 0, %s203
      %s206 = sphi 0, %s205
      %s220 = sphi 0, %s206
      %s224 = sphi 0, %s224
      %s226 = sphi 0, %s224
      %s227 = sphi 0, %s226
      %s241 = sphi 0, %s227
      %s245 = sphi 0, %s245
      %s247 = sphi 0, %s245
      %s248 = sphi 0, %s247
      %s262 = sphi 0, %s248
      %s266 = sphi 0, %s266
      %s268 = sphi 0, %s266
      %s269 = sphi 0, %s268
      %s283 = sphi 0, %s269
      %s287 = sphi 0, %s287
      %s289 = sphi 0, %s287
      %s290 = sphi 0, %s289
      %s304 = sphi 0, %s290
      %s308 = sphi 0, %s308
      %s310 = sphi 0, %s308
      %s311 = sphi 0, %s310
      %s325 = sphi 0, %s311
      %s329 = sphi 0, %s329
      %s331 = sphi 0, %s329
      %s332 = sphi 0, %s331
      %s346 = sphi 0, %s332
      %s350 = sphi 0, %s350
      %s352 = sphi 0, %s350
      %s353 = sphi 0, %s352
      %s367 = sphi 0, %s353
    $region4: #{time_freq_net_forward.1} parent=1 // loop_header_branch
      %31 = sbr.rel (%p29) target = $region8
    $region5: #{time_freq_net_forward.1} parent=1 // loop_body
      %s33 = ssub.s32 %s28, 1
      %s34 = ssub.s32 %s28, 2
      %s35 = sadd.s32 %s28, 1
      %s37 = sadd.s32 %s36, 1
      %p40 = scmp.eq.s32.totalorder %s28, 3
      %p41 = scmp.ne.s32.totalorder %s36, %s38
      %p42 = scmp.eq.s32.totalorder %s28, 0
      %p43 = por %p41, %p42
      %p44 = scmp.ne.s32.totalorder %s36, %s38
      %p45 = scmp.eq.s32.totalorder %s33, 3
      %p46 = por %p44, %p45
      %p47 = scmp.ne.s32.totalorder %s38, %s39
      %p48 = scmp.eq.s32.totalorder %s33, 0
      %p49 = por %p47, %p48
      %p50 = scmp.ne.s32.totalorder %s38, %s39
      %p51 = scmp.eq.s32.totalorder %s34, 3
      %p52 = por %p50, %p51
      %p54 = scmp.ne.s32.totalorder %s39, %s53
      %p55 = scmp.eq.s32.totalorder %s34, 0
      %p56 = por %p54, %p55
      %s58 = sadd.s32 %s57, 1
      %p61 = scmp.eq.s32.totalorder %s28, 3
      %p62 = scmp.ne.s32.totalorder %s57, %s59
      %p63 = scmp.eq.s32.totalorder %s28, 0
      %p64 = por %p62, %p63
      %p65 = scmp.ne.s32.totalorder %s57, %s59
      %p66 = scmp.eq.s32.totalorder %s33, 3
      %p67 = por %p65, %p66
      %p68 = scmp.ne.s32.totalorder %s59, %s60
      %p69 = scmp.eq.s32.totalorder %s33, 0
      %p70 = por %p68, %p69
      %p71 = scmp.ne.s32.totalorder %s59, %s60
      %p72 = scmp.eq.s32.totalorder %s34, 3
      %p73 = por %p71, %p72
      %p75 = scmp.ne.s32.totalorder %s60, %s74
      %p76 = scmp.eq.s32.totalorder %s34, 0
      %p77 = por %p75, %p76
      %s78 = ssub.s32 %s28, %s35
      %p79 = scmp.eq.s32.totalorder %s78, 0
      %s81 = sadd.s32 %s80, 1
      %s82 = scalar_select %p79, %s80, %s81
      %p85 = pneg %p79
      %p86 = scmp.eq.s32.totalorder %s28, 3
      %p87 = por %p85, %p86
      %p88 = scmp.ne.s32.totalorder %s80, %s83
      %p89 = scmp.eq.s32.totalorder %s28, 0
      %p90 = por %p88, %p89
      %p91 = scmp.ne.s32.totalorder %s80, %s83
      %p92 = scmp.eq.s32.totalorder %s33, 3
      %p93 = por %p91, %p92
      %p94 = scmp.ne.s32.totalorder %s83, %s84
      %p95 = scmp.eq.s32.totalorder %s33, 0
      %p96 = por %p94, %p95
      %p97 = scmp.ne.s32.totalorder %s83, %s84
      %p98 = scmp.eq.s32.totalorder %s34, 3
      %p99 = por %p97, %p98
      %p101 = scmp.ne.s32.totalorder %s84, %s100
      %p102 = scmp.eq.s32.totalorder %s34, 0
      %p103 = por %p101, %p102
      %s104 = ssub.s32 %s28, %s35
      %p105 = scmp.eq.s32.totalorder %s104, 0
      %s107 = sadd.s32 %s106, 1
      %s108 = scalar_select %p105, %s106, %s107
      %p111 = pneg %p105
      %p112 = scmp.eq.s32.totalorder %s28, 3
      %p113 = por %p111, %p112
      %p114 = scmp.ne.s32.totalorder %s106, %s109
      %p115 = scmp.eq.s32.totalorder %s28, 0
      %p116 = por %p114, %p115
      %p117 = scmp.ne.s32.totalorder %s106, %s109
      %p118 = scmp.eq.s32.totalorder %s33, 3
      %p119 = por %p117, %p118
      %p120 = scmp.ne.s32.totalorder %s109, %s110
      %p121 = scmp.eq.s32.totalorder %s33, 0
      %p122 = por %p120, %p121
      %p123 = scmp.ne.s32.totalorder %s109, %s110
      %p124 = scmp.eq.s32.totalorder %s34, 3
      %p125 = por %p123, %p124
      %p127 = scmp.ne.s32.totalorder %s110, %s126
      %p128 = scmp.eq.s32.totalorder %s34, 0
      %p129 = por %p127, %p128
      %s130 = ssub.s32 %s28, %s35
      %p131 = scmp.eq.s32.totalorder %s130, 0
      %s133 = sadd.s32 %s132, 1
      %s134 = scalar_select %p131, %s132, %s133
      %p137 = pneg %p131
      %p138 = scmp.eq.s32.totalorder %s28, 3
      %p139 = por %p137, %p138
      %p140 = scmp.ne.s32.totalorder %s132, %s135
      %p141 = scmp.eq.s32.totalorder %s28, 0
      %p142 = por %p140, %p141
      %p143 = scmp.ne.s32.totalorder %s132, %s135
      %p144 = scmp.eq.s32.totalorder %s33, 3
      %p145 = por %p143, %p144
      %p146 = scmp.ne.s32.totalorder %s135, %s136
      %p147 = scmp.eq.s32.totalorder %s33, 0
      %p148 = por %p146, %p147
      %p149 = scmp.ne.s32.totalorder %s135, %s136
      %p150 = scmp.eq.s32.totalorder %s34, 3
      %p151 = por %p149, %p150
      %p153 = scmp.ne.s32.totalorder %s136, %s152
      %p154 = scmp.eq.s32.totalorder %s34, 0
      %p155 = por %p153, %p154
      %s156 = ssub.s32 %s28, %s35
      %p157 = scmp.eq.s32.totalorder %s156, 0
      %s159 = sadd.s32 %s158, 1
      %s160 = scalar_select %p157, %s158, %s159
      %p163 = pneg %p157
      %p164 = scmp.eq.s32.totalorder %s28, 3
      %p165 = por %p163, %p164
      %p166 = scmp.ne.s32.totalorder %s158, %s161
      %p167 = scmp.eq.s32.totalorder %s28, 0
      %p168 = por %p166, %p167
      %p169 = scmp.ne.s32.totalorder %s158, %s161
      %p170 = scmp.eq.s32.totalorder %s33, 3
      %p171 = por %p169, %p170
      %p172 = scmp.ne.s32.totalorder %s161, %s162
      %p173 = scmp.eq.s32.totalorder %s33, 0
      %p174 = por %p172, %p173
      %p175 = scmp.ne.s32.totalorder %s161, %s162
      %p176 = scmp.eq.s32.totalorder %s34, 3
      %p177 = por %p175, %p176
      %p179 = scmp.ne.s32.totalorder %s162, %s178
      %p180 = scmp.eq.s32.totalorder %s34, 0
      %p181 = por %p179, %p180
      %s183 = sadd.s32 %s182, 1
      %p186 = scmp.eq.s32.totalorder %s28, 3
      %p187 = scmp.ne.s32.totalorder %s182, %s184
      %p188 = scmp.eq.s32.totalorder %s28, 0
      %p189 = por %p187, %p188
      %p190 = scmp.ne.s32.totalorder %s182, %s184
      %p191 = scmp.eq.s32.totalorder %s33, 3
      %p192 = por %p190, %p191
      %p193 = scmp.ne.s32.totalorder %s184, %s185
      %p194 = scmp.eq.s32.totalorder %s33, 0
      %p195 = por %p193, %p194
      %p196 = scmp.ne.s32.totalorder %s184, %s185
      %p197 = scmp.eq.s32.totalorder %s34, 3
      %p198 = por %p196, %p197
      %p200 = scmp.ne.s32.totalorder %s185, %s199
      %p201 = scmp.eq.s32.totalorder %s34, 0
      %p202 = por %p200, %p201
      %s204 = sadd.s32 %s203, 1
      %p207 = scmp.eq.s32.totalorder %s28, 3
      %p208 = scmp.ne.s32.totalorder %s203, %s205
      %p209 = scmp.eq.s32.totalorder %s28, 0
      %p210 = por %p208, %p209
      %p211 = scmp.ne.s32.totalorder %s203, %s205
      %p212 = scmp.eq.s32.totalorder %s33, 3
      %p213 = por %p211, %p212
      %p214 = scmp.ne.s32.totalorder %s205, %s206
      %p215 = scmp.eq.s32.totalorder %s33, 0
      %p216 = por %p214, %p215
      %p217 = scmp.ne.s32.totalorder %s205, %s206
      %p218 = scmp.eq.s32.totalorder %s34, 3
      %p219 = por %p217, %p218
      %p221 = scmp.ne.s32.totalorder %s206, %s220
      %p222 = scmp.eq.s32.totalorder %s34, 0
      %p223 = por %p221, %p222
      %s225 = sadd.s32 %s224, 1
      %p228 = scmp.eq.s32.totalorder %s28, 3
      %p229 = scmp.ne.s32.totalorder %s224, %s226
      %p230 = scmp.eq.s32.totalorder %s28, 0
      %p231 = por %p229, %p230
      %p232 = scmp.ne.s32.totalorder %s224, %s226
      %p233 = scmp.eq.s32.totalorder %s33, 3
      %p234 = por %p232, %p233
      %p235 = scmp.ne.s32.totalorder %s226, %s227
      %p236 = scmp.eq.s32.totalorder %s33, 0
      %p237 = por %p235, %p236
      %p238 = scmp.ne.s32.totalorder %s226, %s227
      %p239 = scmp.eq.s32.totalorder %s34, 3
      %p240 = por %p238, %p239
      %p242 = scmp.ne.s32.totalorder %s227, %s241
      %p243 = scmp.eq.s32.totalorder %s34, 0
      %p244 = por %p242, %p243
      %s246 = sadd.s32 %s245, 1
      %p249 = scmp.eq.s32.totalorder %s28, 3
      %p250 = scmp.ne.s32.totalorder %s245, %s247
      %p251 = scmp.eq.s32.totalorder %s28, 0
      %p252 = por %p250, %p251
      %p253 = scmp.ne.s32.totalorder %s245, %s247
      %p254 = scmp.eq.s32.totalorder %s33, 3
      %p255 = por %p253, %p254
      %p256 = scmp.ne.s32.totalorder %s247, %s248
      %p257 = scmp.eq.s32.totalorder %s33, 0
      %p258 = por %p256, %p257
      %p259 = scmp.ne.s32.totalorder %s247, %s248
      %p260 = scmp.eq.s32.totalorder %s34, 3
      %p261 = por %p259, %p260
      %p263 = scmp.ne.s32.totalorder %s248, %s262
      %p264 = scmp.eq.s32.totalorder %s34, 0
      %p265 = por %p263, %p264
      %s267 = sadd.s32 %s266, 1
      %p270 = scmp.eq.s32.totalorder %s28, 3
      %p271 = scmp.ne.s32.totalorder %s266, %s268
      %p272 = scmp.eq.s32.totalorder %s28, 0
      %p273 = por %p271, %p272
      %p274 = scmp.ne.s32.totalorder %s266, %s268
      %p275 = scmp.eq.s32.totalorder %s33, 3
      %p276 = por %p274, %p275
      %p277 = scmp.ne.s32.totalorder %s268, %s269
      %p278 = scmp.eq.s32.totalorder %s33, 0
      %p279 = por %p277, %p278
      %p280 = scmp.ne.s32.totalorder %s268, %s269
      %p281 = scmp.eq.s32.totalorder %s34, 3
      %p282 = por %p280, %p281
      %p284 = scmp.ne.s32.totalorder %s269, %s283
      %p285 = scmp.eq.s32.totalorder %s34, 0
      %p286 = por %p284, %p285
      %s288 = sadd.s32 %s287, 1
      %p291 = scmp.eq.s32.totalorder %s28, 3
      %p292 = scmp.ne.s32.totalorder %s287, %s289
      %p293 = scmp.eq.s32.totalorder %s28, 0
      %p294 = por %p292, %p293
      %p295 = scmp.ne.s32.totalorder %s287, %s289
      %p296 = scmp.eq.s32.totalorder %s33, 3
      %p297 = por %p295, %p296
      %p298 = scmp.ne.s32.totalorder %s289, %s290
      %p299 = scmp.eq.s32.totalorder %s33, 0
      %p300 = por %p298, %p299
      %p301 = scmp.ne.s32.totalorder %s289, %s290
      %p302 = scmp.eq.s32.totalorder %s34, 3
      %p303 = por %p301, %p302
      %p305 = scmp.ne.s32.totalorder %s290, %s304
      %p306 = scmp.eq.s32.totalorder %s34, 0
      %p307 = por %p305, %p306
      %s309 = sadd.s32 %s308, 1
      %p312 = scmp.eq.s32.totalorder %s28, 3
      %p313 = scmp.ne.s32.totalorder %s308, %s310
      %p314 = scmp.eq.s32.totalorder %s28, 0
      %p315 = por %p313, %p314
      %p316 = scmp.ne.s32.totalorder %s308, %s310
      %p317 = scmp.eq.s32.totalorder %s33, 3
      %p318 = por %p316, %p317
      %p319 = scmp.ne.s32.totalorder %s310, %s311
      %p320 = scmp.eq.s32.totalorder %s33, 0
      %p321 = por %p319, %p320
      %p322 = scmp.ne.s32.totalorder %s310, %s311
      %p323 = scmp.eq.s32.totalorder %s34, 3
      %p324 = por %p322, %p323
      %p326 = scmp.ne.s32.totalorder %s311, %s325
      %p327 = scmp.eq.s32.totalorder %s34, 0
      %p328 = por %p326, %p327
      %s330 = sadd.s32 %s329, 1
      %p333 = scmp.eq.s32.totalorder %s28, 3
      %p334 = scmp.ne.s32.totalorder %s329, %s331
      %p335 = scmp.eq.s32.totalorder %s28, 0
      %p336 = por %p334, %p335
      %p337 = scmp.ne.s32.totalorder %s329, %s331
      %p338 = scmp.eq.s32.totalorder %s33, 3
      %p339 = por %p337, %p338
      %p340 = scmp.ne.s32.totalorder %s331, %s332
      %p341 = scmp.eq.s32.totalorder %s33, 0
      %p342 = por %p340, %p341
      %p343 = scmp.ne.s32.totalorder %s331, %s332
      %p344 = scmp.eq.s32.totalorder %s34, 3
      %p345 = por %p343, %p344
      %p347 = scmp.ne.s32.totalorder %s332, %s346
      %p348 = scmp.eq.s32.totalorder %s34, 0
      %p349 = por %p347, %p348
      %s351 = sadd.s32 %s350, 1
      %p354 = scmp.eq.s32.totalorder %s28, 3
      %p355 = scmp.ne.s32.totalorder %s350, %s352
      %p356 = scmp.eq.s32.totalorder %s28, 0
      %p357 = por %p355, %p356
      %p358 = scmp.ne.s32.totalorder %s350, %s352
      %p359 = scmp.eq.s32.totalorder %s33, 3
      %p360 = por %p358, %p359
      %p361 = scmp.ne.s32.totalorder %s352, %s353
      %p362 = scmp.eq.s32.totalorder %s33, 0
      %p363 = por %p361, %p362
      %p364 = scmp.ne.s32.totalorder %s352, %s353
      %p365 = scmp.eq.s32.totalorder %s34, 3
      %p366 = por %p364, %p365
      %p368 = scmp.ne.s32.totalorder %s353, %s367
      %p369 = scmp.eq.s32.totalorder %s34, 0
      %p370 = por %p368, %p369
      %p371 = scmp.le.s32.totalorder 1, %s28
      %p372 = scmp.lt.s32.totalorder %s28, 5
      %p373 = pnand %p371, %p372
      %p374 = pneg %p373
      // Predicated region
      $region9: #{time_freq_net_forward.1} parent=5 // pred_check
        _
      $region10: #{time_freq_net_forward.1} parent=5 // pred_check_branch
        %376 = sbr.rel (%p373) target = $region12
      $region11: #{time_freq_net_forward.1} parent=5 // pred_region
        %s377 = ssub.s32 %s28, 1
        // Predicated region
        $region13: #{time_freq_net_forward.1} parent=11 // pred_check
          %p378 = pneg %p49
        $region14: #{time_freq_net_forward.1} parent=11 // pred_check_branch
          %380 = sbr.rel (%p378) target = $region16
        $region15: #{time_freq_net_forward.1} parent=11 // pred_region
          _
        $region16: #{time_freq_net_forward.1} parent=11 // pred_fallthru
          _
        // Predicated region
        $region17: #{time_freq_net_forward.1} parent=11 // pred_check
          %p381 = pneg %p70
        $region18: #{time_freq_net_forward.1} parent=11 // pred_check_branch
          %383 = sbr.rel (%p381) target = $region20
        $region19: #{time_freq_net_forward.1} parent=11 // pred_region
          _
        $region20: #{time_freq_net_forward.1} parent=11 // pred_fallthru
          _
        // Predicated region
        $region21: #{time_freq_net_forward.1} parent=11 // pred_check
          %p384 = pneg %p195
        $region22: #{time_freq_net_forward.1} parent=11 // pred_check_branch
          %386 = sbr.rel (%p384) target = $region24
        $region23: #{time_freq_net_forward.1} parent=11 // pred_region
          _
        $region24: #{time_freq_net_forward.1} parent=11 // pred_fallthru
          _
        // Predicated region
        $region25: #{time_freq_net_forward.1} parent=11 // pred_check
          %p387 = pneg %p216
        $region26: #{time_freq_net_forward.1} parent=11 // pred_check_branch
          %389 = sbr.rel (%p387) target = $region28
        $region27: #{time_freq_net_forward.1} parent=11 // pred_region
          _
        $region28: #{time_freq_net_forward.1} parent=11 // pred_fallthru
          _
        // Predicated region
        $region29: #{time_freq_net_forward.1} parent=11 // pred_check
          %p390 = pneg %p237
        $region30: #{time_freq_net_forward.1} parent=11 // pred_check_branch
          %392 = sbr.rel (%p390) target = $region32
        $region31: #{time_freq_net_forward.1} parent=11 // pred_region
          %s394 = ssub.s32 8192, 8192
          %395 = vsyncadd [#allocation7], %s394
          %s396 = sshll.u32 [#allocation8], 4
          %s397 = int_to_ptr.vmem [resolvable:$true] %s396
          %402 = dma.hbm_to_vmem [thread:$0]  %s8, 8192, %s397, [#allocation7], 256, 256, 16
        $region32: #{time_freq_net_forward.1} parent=11 // pred_fallthru
          _
        // Predicated region
        $region33: #{time_freq_net_forward.1} parent=11 // pred_check
          %p403 = pneg %p258
        $region34: #{time_freq_net_forward.1} parent=11 // pred_check_branch
          %405 = sbr.rel (%p403) target = $region36
        $region35: #{time_freq_net_forward.1} parent=11 // pred_region
          _
        $region36: #{time_freq_net_forward.1} parent=11 // pred_fallthru
          _
        // Predicated region
        $region37: #{time_freq_net_forward.1} parent=11 // pred_check
          %p406 = pneg %p279
        $region38: #{time_freq_net_forward.1} parent=11 // pred_check_branch
          %408 = sbr.rel (%p406) target = $region40
        $region39: #{time_freq_net_forward.1} parent=11 // pred_region
          _
        $region40: #{time_freq_net_forward.1} parent=11 // pred_fallthru
          _
        // Predicated region
        $region41: #{time_freq_net_forward.1} parent=11 // pred_check
          %p409 = pneg %p300
        $region42: #{time_freq_net_forward.1} parent=11 // pred_check_branch
          %411 = sbr.rel (%p409) target = $region44
        $region43: #{time_freq_net_forward.1} parent=11 // pred_region
          _
        $region44: #{time_freq_net_forward.1} parent=11 // pred_fallthru
          _
        // Predicated region
        $region45: #{time_freq_net_forward.1} parent=11 // pred_check
          %p412 = pneg %p321
        $region46: #{time_freq_net_forward.1} parent=11 // pred_check_branch
          %414 = sbr.rel (%p412) target = $region48
        $region47: #{time_freq_net_forward.1} parent=11 // pred_region
          _
        $region48: #{time_freq_net_forward.1} parent=11 // pred_fallthru
          _
        // Predicated region
        $region49: #{time_freq_net_forward.1} parent=11 // pred_check
          %p415 = pneg %p342
        $region50: #{time_freq_net_forward.1} parent=11 // pred_check_branch
          %417 = sbr.rel (%p415) target = $region52
        $region51: #{time_freq_net_forward.1} parent=11 // pred_region
          _
        $region52: #{time_freq_net_forward.1} parent=11 // pred_fallthru
          _
      $region12: #{time_freq_net_forward.1} parent=5 // pred_fallthru
        _
      %p418 = scmp.lt.s32.totalorder %s28, 4
      // Predicated region
      $region53: #{time_freq_net_forward.1} parent=5 // pred_check
        %p419 = pneg %p418
      $region54: #{time_freq_net_forward.1} parent=5 // pred_check_branch
        %421 = sbr.rel (%p419) target = $region56
      $region55: #{time_freq_net_forward.1} parent=5 // pred_region
        // Predicated region
        $region57: #{time_freq_net_forward.1} parent=55 // pred_check
          %p422 = pneg %p90
        $region58: #{time_freq_net_forward.1} parent=55 // pred_check_branch
          %424 = sbr.rel (%p422) target = $region60
        $region59: #{time_freq_net_forward.1} parent=55 // pred_region
          %s425 = sand.u32 %s80, 1
          %s426 = scalar_lea.sflag [#allocation5], %s425
          %s427 = sand.u32 %s80, 1
          %s428 = smul.addr %s427, 512
          %s429 = scalar_lea.vmem [#allocation4], %s428
          %s430 = smul.u32 2, %s28
          %s432 = ssub.s32 8192, 8192
          %433 = vsyncadd %s426, %s432
          %s434 = smul.addr %s430, 128
          %s435 = scalar_lea.hbm %s2, %s434
          %s436 = sshll.u32 %s429, 4
          %s437 = int_to_ptr.vmem [resolvable:$true] %s436
          %442 = dma.hbm_to_vmem [thread:$0]  %s435, 8192, %s437, %s426, 1024, 256, 16
        $region60: #{time_freq_net_forward.1} parent=55 // pred_fallthru
          _
        // Predicated region
        $region61: #{time_freq_net_forward.1} parent=55 // pred_check
          %p443 = pneg %p116
        $region62: #{time_freq_net_forward.1} parent=55 // pred_check_branch
          %445 = sbr.rel (%p443) target = $region64
        $region63: #{time_freq_net_forward.1} parent=55 // pred_region
          %s446 = smul.u32 2, %s28
          %p447 = scmp.lt.s32.totalorder %s446, 7
          %s448 = scalar_select %p447, %s446, 7
          %s449 = scalar_lea.vmem %s3, %s448
          %s450 = smul.u32 2, %s28
        $region64: #{time_freq_net_forward.1} parent=55 // pred_fallthru
          _
        // Predicated region
        $region65: #{time_freq_net_forward.1} parent=55 // pred_check
          %p451 = pneg %p142
        $region66: #{time_freq_net_forward.1} parent=55 // pred_check_branch
          %453 = sbr.rel (%p451) target = $region68
        $region67: #{time_freq_net_forward.1} parent=55 // pred_region
          %s454 = smul.u32 2, %s28
          %p455 = scmp.lt.s32.totalorder %s454, 7
          %s456 = scalar_select %p455, %s454, 7
          %s457 = scalar_lea.vmem %s4, %s456
          %s458 = smul.u32 2, %s28
        $region68: #{time_freq_net_forward.1} parent=55 // pred_fallthru
          _
        // Predicated region
        $region69: #{time_freq_net_forward.1} parent=55 // pred_check
          %p459 = pneg %p168
        $region70: #{time_freq_net_forward.1} parent=55 // pred_check_branch
          %461 = sbr.rel (%p459) target = $region72
        $region71: #{time_freq_net_forward.1} parent=55 // pred_region
          %s462 = sand.u32 %s28, 1
          %s463 = scalar_lea.sflag [#allocation7], %s462
          %s464 = sand.u32 %s158, 1
          %s465 = smul.addr %s464, 512
          %s466 = scalar_lea.vmem [#allocation6], %s465
          %s467 = smul.u32 8, %s28
          %s469 = ssub.s32 8192, 8192
          %470 = vsyncadd %s463, %s469
          %s471 = smul.addr %s467, 8
          %s472 = smul.addr %s471, 128
          %s473 = scalar_lea.hbm %s5, %s472
          %s474 = sshll.u32 %s466, 4
          %s475 = int_to_ptr.vmem [resolvable:$true] %s474
          %480 = dma.hbm_to_vmem [thread:$0]  %s473, 8192, %s475, %s463, 1024, 1024, 64
        $region72: #{time_freq_net_forward.1} parent=55 // pred_fallthru
          _
      $region56: #{time_freq_net_forward.1} parent=5 // pred_fallthru
        _
      %p481 = scmp.le.s32.totalorder 1, %s28
      %p482 = scmp.lt.s32.totalorder %s28, 5
      %p483 = pnand %p481, %p482
      %p484 = pneg %p483
      // Predicated region
      $region73: #{time_freq_net_forward.1} parent=5 // pred_check
        _
      $region74: #{time_freq_net_forward.1} parent=5 // pred_check_branch
        %486 = sbr.rel (%p483) target = $region76
      $region75: #{time_freq_net_forward.1} parent=5 // pred_region
        %s487 = ssub.s32 %s28, 1
        %s488 = sand.u32 %s83, 1
        %s489 = scalar_lea.sflag [#allocation5], %s488
        %s490 = sand.u32 %s83, 1
        %s491 = smul.addr %s490, 512
        %s492 = scalar_lea.vmem [#allocation4], %s491
        // Predicated region
        $region77: #{time_freq_net_forward.1} parent=75 // pred_check
          %p493 = pneg %p96
        $region78: #{time_freq_net_forward.1} parent=75 // pred_check_branch
          %495 = sbr.rel (%p493) target = $region80
        $region79: #{time_freq_net_forward.1} parent=75 // pred_region
          %496 = dma.done %s489, 8192
        $region80: #{time_freq_net_forward.1} parent=75 // pred_fallthru
          _
        %s497 = sand.u32 %s33, 1
        %s498 = scalar_lea.sflag [#allocation7], %s497
        %s499 = sand.u32 %s161, 1
        %s500 = smul.addr %s499, 512
        %s501 = scalar_lea.vmem [#allocation6], %s500
        // Predicated region
        $region81: #{time_freq_net_forward.1} parent=75 // pred_check
          %p502 = pneg %p174
        $region82: #{time_freq_net_forward.1} parent=75 // pred_check_branch
          %504 = sbr.rel (%p502) target = $region84
        $region83: #{time_freq_net_forward.1} parent=75 // pred_region
          %505 = dma.done %s498, 8192
        $region84: #{time_freq_net_forward.1} parent=75 // pred_fallthru
          _
        // Predicated region
        $region85: #{time_freq_net_forward.1} parent=75 // pred_check
          %p506 = pneg %p237
        $region86: #{time_freq_net_forward.1} parent=75 // pred_check_branch
          %508 = sbr.rel (%p506) target = $region88
        $region87: #{time_freq_net_forward.1} parent=75 // pred_region
          %509 = dma.done [#allocation7], 8192
        $region88: #{time_freq_net_forward.1} parent=75 // pred_fallthru
          _
        %p510 = pneg %p49
        %p511 = pneg %p46
        %p512 = pneg %p70
        %p513 = pneg %p67
        %s514 = sand.u32 %s83, 1
        %s515 = scalar_lea.sflag [#allocation5], %s514
        %s516 = sand.u32 %s83, 1
        %s517 = smul.addr %s516, 512
        %s518 = scalar_lea.vmem [#allocation4], %s517
        %p519 = pneg %p96
        %p520 = pneg %p93
        %s521 = smul.u32 2, %s33
        %p522 = scmp.lt.s32.totalorder %s521, 7
        %s523 = scalar_select %p522, %s521, 7
        %s524 = scalar_lea.vmem %s3, %s523
        %p525 = pneg %p122
        %p526 = pneg %p119
        %s527 = smul.u32 2, %s33
        %p528 = scmp.lt.s32.totalorder %s527, 7
        %s529 = scalar_select %p528, %s527, 7
        %s530 = scalar_lea.vmem %s4, %s529
        %p531 = pneg %p148
        %p532 = pneg %p145
        %s533 = sand.u32 %s33, 1
        %s534 = scalar_lea.sflag [#allocation7], %s533
        %s535 = sand.u32 %s161, 1
        %s536 = smul.addr %s535, 512
        %s537 = scalar_lea.vmem [#allocation6], %s536
        %p538 = pneg %p174
        %p539 = pneg %p171
        %p540 = pneg %p195
        %p541 = pneg %p192
        %p542 = pneg %p216
        %p543 = pneg %p213
        %p544 = pneg %p237
        %p545 = pneg %p234
        %p546 = pneg %p258
        %p547 = pneg %p255
        %p548 = pneg %p279
        %p549 = pneg %p276
        %p550 = pneg %p300
        %p551 = pneg %p297
        %p552 = pneg %p321
        %p553 = pneg %p318
        %p554 = pneg %p342
        %p555 = pneg %p339
        %p556 = pneg %p363
        %p557 = pneg %p360
        %s558 = smul.u32 2, %s33
        %s559 = smul.u32 2, %s33
        %p560 = scmp.lt.s32.totalorder %s559, 7
        %s561 = scalar_select %p560, %s559, 7
        %s562 = scalar_lea.vmem %s3, %s561
        %s563 = smul.u32 2, %s33
        %s564 = smul.u32 2, %s33
        %p565 = scmp.lt.s32.totalorder %s564, 7
        %s566 = scalar_select %p565, %s564, 7
        %s567 = scalar_lea.vmem %s4, %s566
        %s568 = smul.u32 2, %s33
        %s569 = smul.u32 8, %s33
        %p570 = scmp.eq.s32.totalorder %s33, 0
        // Predicated region
        $region89: #{time_freq_net_forward.1} parent=75 // pred_check
          %p571 = pneg %p570
        $region90: #{time_freq_net_forward.1} parent=75 // pred_check_branch
          %573 = sbr.rel (%p571) target = $region92
        $region91: #{time_freq_net_forward.1} parent=75 // pred_region
          %574 = vst [vmem:[#allocation2] sm:$0xff] 0.0
          %575 = vst [vmem:[#allocation2 + $0x8] sm:$0xff] 0.0
          %576 = vst [vmem:[#allocation2 + $0x10] sm:$0xff] 0.0
          %577 = vst [vmem:[#allocation2 + $0x18] sm:$0xff] 0.0
          %578 = vst [vmem:[#allocation2 + $0x20] sm:$0xff] 0.0
          %579 = vst [vmem:[#allocation2 + $0x28] sm:$0xff] 0.0
          %580 = vst [vmem:[#allocation2 + $0x30] sm:$0xff] 0.0
          %581 = vst [vmem:[#allocation2 + $0x38] sm:$0xff] 0.0
        $region92: #{time_freq_net_forward.1} parent=75 // pred_fallthru
          _
        %v582 = vld [vmem:[%s0] sm:$0xff]
        %v583 = vld [vmem:[%s0 + $0x8] sm:$0xff]
        %v584 = vld [vmem:[%s0 + $0x10] sm:$0xff]
        %v585 = vld [vmem:[%s0 + $0x18] sm:$0xff]
        %v586 = vld [vmem:[%s492] sm:$0xff]
        %v587 = vld [vmem:[%s492 + $0x8] sm:$0xff]
        %v588 = vld [vmem:[%s492 + $0x10] sm:$0xff]
        %v589 = vld [vmem:[%s492 + $0x18] sm:$0xff]
        %v590 = vld [vmem:[%s492 + $0x20] sm:$0xff]
        %v591 = vld [vmem:[%s492 + $0x28] sm:$0xff]
        %v592 = vld [vmem:[%s492 + $0x30] sm:$0xff]
        %v593 = vld [vmem:[%s492 + $0x38] sm:$0xff]
        %v594 = vld [vmem:[%s492 + $0x40] sm:$0xff]
        %v595 = vld [vmem:[%s492 + $0x48] sm:$0xff]
        %v596 = vld [vmem:[%s492 + $0x50] sm:$0xff]
        %v597 = vld [vmem:[%s492 + $0x58] sm:$0xff]
        %v598 = vld [vmem:[%s492 + $0x60] sm:$0xff]
        %v599 = vld [vmem:[%s492 + $0x68] sm:$0xff]
        %v600 = vld [vmem:[%s492 + $0x70] sm:$0xff]
        %v601 = vld [vmem:[%s492 + $0x78] sm:$0xff]
        %v602 = vld [vmem:[%s492 + $0x80] sm:$0xff]
        %v603 = vld [vmem:[%s492 + $0x88] sm:$0xff]
        %v604 = vld [vmem:[%s492 + $0x90] sm:$0xff]
        %v605 = vld [vmem:[%s492 + $0x98] sm:$0xff]
        %v606 = vld [vmem:[%s492 + $0xa0] sm:$0xff]
        %v607 = vld [vmem:[%s492 + $0xa8] sm:$0xff]
        %v608 = vld [vmem:[%s492 + $0xb0] sm:$0xff]
        %v609 = vld [vmem:[%s492 + $0xb8] sm:$0xff]
        %v610 = vld [vmem:[%s492 + $0xc0] sm:$0xff]
        %v611 = vld [vmem:[%s492 + $0xc8] sm:$0xff]
        %v612 = vld [vmem:[%s492 + $0xd0] sm:$0xff]
        %v613 = vld [vmem:[%s492 + $0xd8] sm:$0xff]
        %v614 = vld [vmem:[%s492 + $0xe0] sm:$0xff]
        %v615 = vld [vmem:[%s492 + $0xe8] sm:$0xff]
        %v616 = vld [vmem:[%s492 + $0xf0] sm:$0xff]
        %v617 = vld [vmem:[%s492 + $0xf8] sm:$0xff]
        %v618 = vld [vmem:[%s492 + $0x100] sm:$0xff]
        %v619 = vld [vmem:[%s492 + $0x108] sm:$0xff]
        %v620 = vld [vmem:[%s492 + $0x110] sm:$0xff]
        %v621 = vld [vmem:[%s492 + $0x118] sm:$0xff]
        %v622 = vld [vmem:[%s492 + $0x120] sm:$0xff]
        %v623 = vld [vmem:[%s492 + $0x128] sm:$0xff]
        %v624 = vld [vmem:[%s492 + $0x130] sm:$0xff]
        %v625 = vld [vmem:[%s492 + $0x138] sm:$0xff]
        %v626 = vld [vmem:[%s492 + $0x140] sm:$0xff]
        %v627 = vld [vmem:[%s492 + $0x148] sm:$0xff]
        %v628 = vld [vmem:[%s492 + $0x150] sm:$0xff]
        %v629 = vld [vmem:[%s492 + $0x158] sm:$0xff]
        %v630 = vld [vmem:[%s492 + $0x160] sm:$0xff]
        %v631 = vld [vmem:[%s492 + $0x168] sm:$0xff]
        %v632 = vld [vmem:[%s492 + $0x170] sm:$0xff]
        %v633 = vld [vmem:[%s492 + $0x178] sm:$0xff]
        %v634 = vld [vmem:[%s492 + $0x180] sm:$0xff]
        %v635 = vld [vmem:[%s492 + $0x188] sm:$0xff]
        %v636 = vld [vmem:[%s492 + $0x190] sm:$0xff]
        %v637 = vld [vmem:[%s492 + $0x198] sm:$0xff]
        %v638 = vld [vmem:[%s492 + $0x1a0] sm:$0xff]
        %v639 = vld [vmem:[%s492 + $0x1a8] sm:$0xff]
        %v640 = vld [vmem:[%s492 + $0x1b0] sm:$0xff]
        %v641 = vld [vmem:[%s492 + $0x1b8] sm:$0xff]
        %v642 = vld [vmem:[%s492 + $0x1c0] sm:$0xff]
        %v643 = vld [vmem:[%s492 + $0x1c8] sm:$0xff]
        %v644 = vld [vmem:[%s492 + $0x1d0] sm:$0xff]
        %v645 = vld [vmem:[%s492 + $0x1d8] sm:$0xff]
        %v646 = vld [vmem:[%s492 + $0x1e0] sm:$0xff]
        %v647 = vld [vmem:[%s492 + $0x1e8] sm:$0xff]
        %v648 = vld [vmem:[%s492 + $0x1f0] sm:$0xff]
        %v649 = vld [vmem:[%s492 + $0x1f8] sm:$0xff]
        %v650 = vunpack.c.l.s8.bf16 %v586
        %v651 = vunpack.c.l.s8.bf16 %v587
        %v652 = vunpack.c.h.s8.bf16 %v586
        %v653 = vunpack.c.h.s8.bf16 %v587
        %v654 = vunpack.c.l.s8.bf16 %v588
        %v655 = vunpack.c.l.s8.bf16 %v589
        %v656 = vunpack.c.h.s8.bf16 %v588
        %v657 = vunpack.c.h.s8.bf16 %v589
        %v658 = vunpack.c.l.s8.bf16 %v590
        %v659 = vunpack.c.l.s8.bf16 %v591
        %v660 = vunpack.c.h.s8.bf16 %v590
        %v661 = vunpack.c.h.s8.bf16 %v591
        %v662 = vunpack.c.l.s8.bf16 %v592
        %v663 = vunpack.c.l.s8.bf16 %v593
        %v664 = vunpack.c.h.s8.bf16 %v592
        %v665 = vunpack.c.h.s8.bf16 %v593
        %v666 = vunpack.c.l.s8.bf16 %v594
        %v667 = vunpack.c.l.s8.bf16 %v595
        %v668 = vunpack.c.h.s8.bf16 %v594
        %v669 = vunpack.c.h.s8.bf16 %v595
        %v670 = vunpack.c.l.s8.bf16 %v596
        %v671 = vunpack.c.l.s8.bf16 %v597
        %v672 = vunpack.c.h.s8.bf16 %v596
        %v673 = vunpack.c.h.s8.bf16 %v597
        %v674 = vunpack.c.l.s8.bf16 %v598
        %v675 = vunpack.c.l.s8.bf16 %v599
        %v676 = vunpack.c.h.s8.bf16 %v598
        %v677 = vunpack.c.h.s8.bf16 %v599
        %v678 = vunpack.c.l.s8.bf16 %v600
        %v679 = vunpack.c.l.s8.bf16 %v601
        %v680 = vunpack.c.h.s8.bf16 %v600
        %v681 = vunpack.c.h.s8.bf16 %v601
        %v682 = vunpack.c.l.s8.bf16 %v602
        %v683 = vunpack.c.l.s8.bf16 %v603
        %v684 = vunpack.c.h.s8.bf16 %v602
        %v685 = vunpack.c.h.s8.bf16 %v603
        %v686 = vunpack.c.l.s8.bf16 %v604
        %v687 = vunpack.c.l.s8.bf16 %v605
        %v688 = vunpack.c.h.s8.bf16 %v604
        %v689 = vunpack.c.h.s8.bf16 %v605
        %v690 = vunpack.c.l.s8.bf16 %v606
        %v691 = vunpack.c.l.s8.bf16 %v607
        %v692 = vunpack.c.h.s8.bf16 %v606
        %v693 = vunpack.c.h.s8.bf16 %v607
        %v694 = vunpack.c.l.s8.bf16 %v608
        %v695 = vunpack.c.l.s8.bf16 %v609
        %v696 = vunpack.c.h.s8.bf16 %v608
        %v697 = vunpack.c.h.s8.bf16 %v609
        %v698 = vunpack.c.l.s8.bf16 %v610
        %v699 = vunpack.c.l.s8.bf16 %v611
        %v700 = vunpack.c.h.s8.bf16 %v610
        %v701 = vunpack.c.h.s8.bf16 %v611
        %v702 = vunpack.c.l.s8.bf16 %v612
        %v703 = vunpack.c.l.s8.bf16 %v613
        %v704 = vunpack.c.h.s8.bf16 %v612
        %v705 = vunpack.c.h.s8.bf16 %v613
        %v706 = vunpack.c.l.s8.bf16 %v614
        %v707 = vunpack.c.l.s8.bf16 %v615
        %v708 = vunpack.c.h.s8.bf16 %v614
        %v709 = vunpack.c.h.s8.bf16 %v615
        %v710 = vunpack.c.l.s8.bf16 %v616
        %v711 = vunpack.c.l.s8.bf16 %v617
        %v712 = vunpack.c.h.s8.bf16 %v616
        %v713 = vunpack.c.h.s8.bf16 %v617
        %v714 = vunpack.c.l.s8.bf16 %v618
        %v715 = vunpack.c.l.s8.bf16 %v619
        %v716 = vunpack.c.h.s8.bf16 %v618
        %v717 = vunpack.c.h.s8.bf16 %v619
        %v718 = vunpack.c.l.s8.bf16 %v620
        %v719 = vunpack.c.l.s8.bf16 %v621
        %v720 = vunpack.c.h.s8.bf16 %v620
        %v721 = vunpack.c.h.s8.bf16 %v621
        %v722 = vunpack.c.l.s8.bf16 %v622
        %v723 = vunpack.c.l.s8.bf16 %v623
        %v724 = vunpack.c.h.s8.bf16 %v622
        %v725 = vunpack.c.h.s8.bf16 %v623
        %v726 = vunpack.c.l.s8.bf16 %v624
        %v727 = vunpack.c.l.s8.bf16 %v625
        %v728 = vunpack.c.h.s8.bf16 %v624
        %v729 = vunpack.c.h.s8.bf16 %v625
        %v730 = vunpack.c.l.s8.bf16 %v626
        %v731 = vunpack.c.l.s8.bf16 %v627
        %v732 = vunpack.c.h.s8.bf16 %v626
        %v733 = vunpack.c.h.s8.bf16 %v627
        %v734 = vunpack.c.l.s8.bf16 %v628
        %v735 = vunpack.c.l.s8.bf16 %v629
        %v736 = vunpack.c.h.s8.bf16 %v628
        %v737 = vunpack.c.h.s8.bf16 %v629
        %v738 = vunpack.c.l.s8.bf16 %v630
        %v739 = vunpack.c.l.s8.bf16 %v631
        %v740 = vunpack.c.h.s8.bf16 %v630
        %v741 = vunpack.c.h.s8.bf16 %v631
        %v742 = vunpack.c.l.s8.bf16 %v632
        %v743 = vunpack.c.l.s8.bf16 %v633
        %v744 = vunpack.c.h.s8.bf16 %v632
        %v745 = vunpack.c.h.s8.bf16 %v633
        %v746 = vunpack.c.l.s8.bf16 %v634
        %v747 = vunpack.c.l.s8.bf16 %v635
        %v748 = vunpack.c.h.s8.bf16 %v634
        %v749 = vunpack.c.h.s8.bf16 %v635
        %v750 = vunpack.c.l.s8.bf16 %v636
        %v751 = vunpack.c.l.s8.bf16 %v637
        %v752 = vunpack.c.h.s8.bf16 %v636
        %v753 = vunpack.c.h.s8.bf16 %v637
        %v754 = vunpack.c.l.s8.bf16 %v638
        %v755 = vunpack.c.l.s8.bf16 %v639
        %v756 = vunpack.c.h.s8.bf16 %v638
        %v757 = vunpack.c.h.s8.bf16 %v639
        %v758 = vunpack.c.l.s8.bf16 %v640
        %v759 = vunpack.c.l.s8.bf16 %v641
        %v760 = vunpack.c.h.s8.bf16 %v640
        %v761 = vunpack.c.h.s8.bf16 %v641
        %v762 = vunpack.c.l.s8.bf16 %v642
        %v763 = vunpack.c.l.s8.bf16 %v643
        %v764 = vunpack.c.h.s8.bf16 %v642
        %v765 = vunpack.c.h.s8.bf16 %v643
        %v766 = vunpack.c.l.s8.bf16 %v644
        %v767 = vunpack.c.l.s8.bf16 %v645
        %v768 = vunpack.c.h.s8.bf16 %v644
        %v769 = vunpack.c.h.s8.bf16 %v645
        %v770 = vunpack.c.l.s8.bf16 %v646
        %v771 = vunpack.c.l.s8.bf16 %v647
        %v772 = vunpack.c.h.s8.bf16 %v646
        %v773 = vunpack.c.h.s8.bf16 %v647
        %v774 = vunpack.c.l.s8.bf16 %v648
        %v775 = vunpack.c.l.s8.bf16 %v649
        %v776 = vunpack.c.h.s8.bf16 %v648
        %v777 = vunpack.c.h.s8.bf16 %v649
        %v782 = vunpack.c.l.b16 %v582
        %v783 = vunpack.c.h.b16 %v582
        %v784 = vunpack.c.l.b16 %v583
        %v785 = vunpack.c.h.b16 %v583
        %v786 = vunpack.c.l.b16 %v584
        %v787 = vunpack.c.h.b16 %v584
        %v788 = vunpack.c.l.b16 %v585
        %v789 = vunpack.c.h.b16 %v585
        %v790 = vpack.c.b16 %v782, %v782
        %v791 = vpack.c.b16 %v783, %v783
        %v792 = vpack.c.b16 %v784, %v784
        %v793 = vpack.c.b16 %v785, %v785
        %v794 = vpack.c.b16 %v786, %v786
        %v795 = vpack.c.b16 %v787, %v787
        %v796 = vpack.c.b16 %v788, %v788
        %v797 = vpack.c.b16 %v789, %v789
        %806 = vmatprep.subr.bf16.mxu0 %v665
        %807 = vmatpush1.bf16.msra.mxu0 %v664
        %808 = vmatprep.subr.bf16.mxu0 %v663
        %809 = vmatpush1.bf16.msra.mxu0 %v662
        %810 = vmatprep.subr.bf16.mxu0 %v661
        %811 = vmatpush1.bf16.msra.mxu0 %v660
        %812 = vmatprep.subr.bf16.mxu0 %v659
        %813 = vmatpush1.bf16.msra.mxu0 %v658
        %814 = vmatprep.subr.bf16.mxu0 %v657
        %815 = vmatpush1.bf16.msra.mxu0 %v656
        %816 = vmatprep.subr.bf16.mxu0 %v655
        %817 = vmatpush1.bf16.msra.mxu0 %v654
        %818 = vmatprep.subr.bf16.mxu0 %v653
        %819 = vmatpush1.bf16.msra.mxu0 %v652
        %820 = vmatprep.subr.bf16.mxu0 %v651
        %821 = vmatpush1.bf16.msra.mxu0 %v650
        %822 = vmatprep.subr.bf16.mxu0 %v681
        %823 = vmatpush2.bf16.msra.mxu0 %v680
        %824 = vmatprep.subr.bf16.mxu0 %v679
        %825 = vmatpush2.bf16.msra.mxu0 %v678
        %826 = vmatprep.subr.bf16.mxu0 %v677
        %827 = vmatpush2.bf16.msra.mxu0 %v676
        %828 = vmatprep.subr.bf16.mxu0 %v675
        %829 = vmatpush2.bf16.msra.mxu0 %v674
        %830 = vmatprep.subr.bf16.mxu0 %v673
        %831 = vmatpush2.bf16.msra.mxu0 %v672
        %832 = vmatprep.subr.bf16.mxu0 %v671
        %833 = vmatpush2.bf16.msra.mxu0 %v670
        %834 = vmatprep.subr.bf16.mxu0 %v669
        %835 = vmatpush2.bf16.msra.mxu0 %v668
        %836 = vmatprep.subr.bf16.mxu0 %v667
        %837 = vmatpush2.bf16.msra.mxu0 %v666
        %838 = vmatprep.mubr.bf16.mxu0 %v791
        %839 = vmatmul.mubr.bf16.gmra.mxu0 %v790
        %v840 = vpop.f32.mrf.mxu0
        %v841 = vadd.f32 0.0, %v840
        %v842 = vpop.f32.mrf.mxu0
        %v843 = vadd.f32 0.0, %v842
        %v844 = vpop.f32.mrf.mxu0
        %v845 = vpop.f32.mrf.mxu0
        %846 = vdwg.mxu0
        %847 = vmatprep.subr.bf16.mxu0 %v697
        %848 = vmatpush1.bf16.msra.mxu0 %v696
        %849 = vmatprep.subr.bf16.mxu0 %v695
        %850 = vmatpush1.bf16.msra.mxu0 %v694
        %851 = vmatprep.subr.bf16.mxu0 %v693
        %852 = vmatpush1.bf16.msra.mxu0 %v692
        %853 = vmatprep.subr.bf16.mxu0 %v691
        %854 = vmatpush1.bf16.msra.mxu0 %v690
        %855 = vmatprep.subr.bf16.mxu0 %v689
        %856 = vmatpush1.bf16.msra.mxu0 %v688
        %857 = vmatprep.subr.bf16.mxu0 %v687
        %858 = vmatpush1.bf16.msra.mxu0 %v686
        %859 = vmatprep.subr.bf16.mxu0 %v685
        %860 = vmatpush1.bf16.msra.mxu0 %v684
        %861 = vmatprep.subr.bf16.mxu0 %v683
        %862 = vmatpush1.bf16.msra.mxu0 %v682
        %863 = vmatprep.subr.bf16.mxu0 %v713
        %864 = vmatpush2.bf16.msra.mxu0 %v712
        %865 = vmatprep.subr.bf16.mxu0 %v711
        %866 = vmatpush2.bf16.msra.mxu0 %v710
        %867 = vmatprep.subr.bf16.mxu0 %v709
        %868 = vmatpush2.bf16.msra.mxu0 %v708
        %869 = vmatprep.subr.bf16.mxu0 %v707
        %870 = vmatpush2.bf16.msra.mxu0 %v706
        %871 = vmatprep.subr.bf16.mxu0 %v705
        %872 = vmatpush2.bf16.msra.mxu0 %v704
        %873 = vmatprep.subr.bf16.mxu0 %v703
        %874 = vmatpush2.bf16.msra.mxu0 %v702
        %875 = vmatprep.subr.bf16.mxu0 %v701
        %876 = vmatpush2.bf16.msra.mxu0 %v700
        %877 = vmatprep.subr.bf16.mxu0 %v699
        %878 = vmatpush2.bf16.msra.mxu0 %v698
        %879 = vmatprep.mubr.bf16.mxu0 %v793
        %880 = vmatmul.mubr.bf16.gmra.mxu0 %v792
        %v881 = vpop.f32.mrf.mxu0
        %v882 = vadd.f32 %v841, %v881
        %v883 = vpop.f32.mrf.mxu0
        %v884 = vadd.f32 %v843, %v883
        %v885 = vpop.f32.mrf.mxu0
        %v886 = vpop.f32.mrf.mxu0
        %887 = vdwg.mxu0
        %888 = vmatprep.subr.bf16.mxu0 %v729
        %889 = vmatpush1.bf16.msra.mxu0 %v728
        %890 = vmatprep.subr.bf16.mxu0 %v727
        %891 = vmatpush1.bf16.msra.mxu0 %v726
        %892 = vmatprep.subr.bf16.mxu0 %v725
        %893 = vmatpush1.bf16.msra.mxu0 %v724
        %894 = vmatprep.subr.bf16.mxu0 %v723
        %895 = vmatpush1.bf16.msra.mxu0 %v722
        %896 = vmatprep.subr.bf16.mxu0 %v721
        %897 = vmatpush1.bf16.msra.mxu0 %v720
        %898 = vmatprep.subr.bf16.mxu0 %v719
        %899 = vmatpush1.bf16.msra.mxu0 %v718
        %900 = vmatprep.subr.bf16.mxu0 %v717
        %901 = vmatpush1.bf16.msra.mxu0 %v716
        %902 = vmatprep.subr.bf16.mxu0 %v715
        %903 = vmatpush1.bf16.msra.mxu0 %v714
        %904 = vmatprep.subr.bf16.mxu0 %v745
        %905 = vmatpush2.bf16.msra.mxu0 %v744
        %906 = vmatprep.subr.bf16.mxu0 %v743
        %907 = vmatpush2.bf16.msra.mxu0 %v742
        %908 = vmatprep.subr.bf16.mxu0 %v741
        %909 = vmatpush2.bf16.msra.mxu0 %v740
        %910 = vmatprep.subr.bf16.mxu0 %v739
        %911 = vmatpush2.bf16.msra.mxu0 %v738
        %912 = vmatprep.subr.bf16.mxu0 %v737
        %913 = vmatpush2.bf16.msra.mxu0 %v736
        %914 = vmatprep.subr.bf16.mxu0 %v735
        %915 = vmatpush2.bf16.msra.mxu0 %v734
        %916 = vmatprep.subr.bf16.mxu0 %v733
        %917 = vmatpush2.bf16.msra.mxu0 %v732
        %918 = vmatprep.subr.bf16.mxu0 %v731
        %919 = vmatpush2.bf16.msra.mxu0 %v730
        %920 = vmatprep.mubr.bf16.mxu0 %v795
        %921 = vmatmul.mubr.bf16.gmra.mxu0 %v794
        %v922 = vpop.f32.mrf.mxu0
        %v923 = vadd.f32 %v882, %v922
        %v924 = vpop.f32.mrf.mxu0
        %v925 = vadd.f32 %v884, %v924
        %v926 = vpop.f32.mrf.mxu0
        %v927 = vpop.f32.mrf.mxu0
        %928 = vdwg.mxu0
        %929 = vmatprep.subr.bf16.mxu0 %v761
        %930 = vmatpush1.bf16.msra.mxu0 %v760
        %931 = vmatprep.subr.bf16.mxu0 %v759
        %932 = vmatpush1.bf16.msra.mxu0 %v758
        %933 = vmatprep.subr.bf16.mxu0 %v757
        %934 = vmatpush1.bf16.msra.mxu0 %v756
        %935 = vmatprep.subr.bf16.mxu0 %v755
        %936 = vmatpush1.bf16.msra.mxu0 %v754
        %937 = vmatprep.subr.bf16.mxu0 %v753
        %938 = vmatpush1.bf16.msra.mxu0 %v752
        %939 = vmatprep.subr.bf16.mxu0 %v751
        %940 = vmatpush1.bf16.msra.mxu0 %v750
        %941 = vmatprep.subr.bf16.mxu0 %v749
        %942 = vmatpush1.bf16.msra.mxu0 %v748
        %943 = vmatprep.subr.bf16.mxu0 %v747
        %944 = vmatpush1.bf16.msra.mxu0 %v746
        %945 = vmatprep.subr.bf16.mxu0 %v777
        %946 = vmatpush2.bf16.msra.mxu0 %v776
        %947 = vmatprep.subr.bf16.mxu0 %v775
        %948 = vmatpush2.bf16.msra.mxu0 %v774
        %949 = vmatprep.subr.bf16.mxu0 %v773
        %950 = vmatpush2.bf16.msra.mxu0 %v772
        %951 = vmatprep.subr.bf16.mxu0 %v771
        %952 = vmatpush2.bf16.msra.mxu0 %v770
        %953 = vmatprep.subr.bf16.mxu0 %v769
        %954 = vmatpush2.bf16.msra.mxu0 %v768
        %955 = vmatprep.subr.bf16.mxu0 %v767
        %956 = vmatpush2.bf16.msra.mxu0 %v766
        %957 = vmatprep.subr.bf16.mxu0 %v765
        %958 = vmatpush2.bf16.msra.mxu0 %v764
        %959 = vmatprep.subr.bf16.mxu0 %v763
        %960 = vmatpush2.bf16.msra.mxu0 %v762
        %961 = vmatprep.mubr.bf16.mxu0 %v797
        %962 = vmatmul.mubr.bf16.gmra.mxu0 %v796
        %v963 = vpop.f32.mrf.mxu0
        %v964 = vadd.f32 %v923, %v963
        %v965 = vpop.f32.mrf.mxu0
        %v966 = vadd.f32 %v925, %v965
        %v967 = vpop.f32.mrf.mxu0
        %v968 = vpop.f32.mrf.mxu0
        %969 = vdwg.mxu0
        %v970 = vld [vmem:[%s562] sm:$0x3]
        %v972 = vlaneseq
        %v973 = vshrl.u32 %v972, 7
        %v974 = vsub.s32 0, %v973
        %v975 = vrot.slane %v970, %v974
        %v976 = vlaneseq
        %v977 = vshrl.u32 %v976, 7
        %v978 = vsub.s32 1, %v977
        %v979 = vrot.slane %v970, %v978
        %v982 = vmul.f32 %v964, %v975
        %v983 = vmul.f32 %v966, %v979
        %v984 = vld [vmem:[%s567] sm:$0x3]
        %v986 = vlaneseq
        %v987 = vshrl.u32 %v986, 7
        %v988 = vsub.s32 0, %v987
        %v989 = vrot.slane %v984, %v988
        %v990 = vlaneseq
        %v991 = vshrl.u32 %v990, 7
        %v992 = vsub.s32 1, %v991
        %v993 = vrot.slane %v984, %v992
        %v996 = vadd.f32 %v982, %v989
        %v997 = vadd.f32 %v983, %v993
        %v998 = vmax.f32 %v996, 0.0
        %v999 = vmax.f32 %v997, 0.0
        %v1000 = vld [vmem:[#allocation2] sm:$0xff]
        %v1001 = vld [vmem:[#allocation2 + $0x8] sm:$0xff]
        %v1002 = vld [vmem:[#allocation2 + $0x10] sm:$0xff]
        %v1003 = vld [vmem:[#allocation2 + $0x18] sm:$0xff]
        %v1004 = vld [vmem:[#allocation2 + $0x20] sm:$0xff]
        %v1005 = vld [vmem:[#allocation2 + $0x28] sm:$0xff]
        %v1006 = vld [vmem:[#allocation2 + $0x30] sm:$0xff]
        %v1007 = vld [vmem:[#allocation2 + $0x38] sm:$0xff]
        %v1008 = vpack.c.bf16 %v998, %v998
        %v1009 = vpack.c.bf16 %v999, %v999
        %v1010 = vld [vmem:[%s501] sm:$0xff]
        %v1011 = vld [vmem:[%s501 + $0x8] sm:$0xff]
        %v1012 = vld [vmem:[%s501 + $0x10] sm:$0xff]
        %v1013 = vld [vmem:[%s501 + $0x18] sm:$0xff]
        %v1014 = vld [vmem:[%s501 + $0x20] sm:$0xff]
        %v1015 = vld [vmem:[%s501 + $0x28] sm:$0xff]
        %v1016 = vld [vmem:[%s501 + $0x30] sm:$0xff]
        %v1017 = vld [vmem:[%s501 + $0x38] sm:$0xff]
        %v1018 = vld [vmem:[%s501 + $0x40] sm:$0xff]
        %v1019 = vld [vmem:[%s501 + $0x48] sm:$0xff]
        %v1020 = vld [vmem:[%s501 + $0x50] sm:$0xff]
        %v1021 = vld [vmem:[%s501 + $0x58] sm:$0xff]
        %v1022 = vld [vmem:[%s501 + $0x60] sm:$0xff]
        %v1023 = vld [vmem:[%s501 + $0x68] sm:$0xff]
        %v1024 = vld [vmem:[%s501 + $0x70] sm:$0xff]
        %v1025 = vld [vmem:[%s501 + $0x78] sm:$0xff]
        %v1026 = vld [vmem:[%s501 + $0x80] sm:$0xff]
        %v1027 = vld [vmem:[%s501 + $0x88] sm:$0xff]
        %v1028 = vld [vmem:[%s501 + $0x90] sm:$0xff]
        %v1029 = vld [vmem:[%s501 + $0x98] sm:$0xff]
        %v1030 = vld [vmem:[%s501 + $0xa0] sm:$0xff]
        %v1031 = vld [vmem:[%s501 + $0xa8] sm:$0xff]
        %v1032 = vld [vmem:[%s501 + $0xb0] sm:$0xff]
        %v1033 = vld [vmem:[%s501 + $0xb8] sm:$0xff]
        %v1034 = vld [vmem:[%s501 + $0xc0] sm:$0xff]
        %v1035 = vld [vmem:[%s501 + $0xc8] sm:$0xff]
        %v1036 = vld [vmem:[%s501 + $0xd0] sm:$0xff]
        %v1037 = vld [vmem:[%s501 + $0xd8] sm:$0xff]
        %v1038 = vld [vmem:[%s501 + $0xe0] sm:$0xff]
        %v1039 = vld [vmem:[%s501 + $0xe8] sm:$0xff]
        %v1040 = vld [vmem:[%s501 + $0xf0] sm:$0xff]
        %v1041 = vld [vmem:[%s501 + $0xf8] sm:$0xff]
        %v1042 = vld [vmem:[%s501 + $0x100] sm:$0xff]
        %v1043 = vld [vmem:[%s501 + $0x108] sm:$0xff]
        %v1044 = vld [vmem:[%s501 + $0x110] sm:$0xff]
        %v1045 = vld [vmem:[%s501 + $0x118] sm:$0xff]
        %v1046 = vld [vmem:[%s501 + $0x120] sm:$0xff]
        %v1047 = vld [vmem:[%s501 + $0x128] sm:$0xff]
        %v1048 = vld [vmem:[%s501 + $0x130] sm:$0xff]
        %v1049 = vld [vmem:[%s501 + $0x138] sm:$0xff]
        %v1050 = vld [vmem:[%s501 + $0x140] sm:$0xff]
        %v1051 = vld [vmem:[%s501 + $0x148] sm:$0xff]
        %v1052 = vld [vmem:[%s501 + $0x150] sm:$0xff]
        %v1053 = vld [vmem:[%s501 + $0x158] sm:$0xff]
        %v1054 = vld [vmem:[%s501 + $0x160] sm:$0xff]
        %v1055 = vld [vmem:[%s501 + $0x168] sm:$0xff]
        %v1056 = vld [vmem:[%s501 + $0x170] sm:$0xff]
        %v1057 = vld [vmem:[%s501 + $0x178] sm:$0xff]
        %v1058 = vld [vmem:[%s501 + $0x180] sm:$0xff]
        %v1059 = vld [vmem:[%s501 + $0x188] sm:$0xff]
        %v1060 = vld [vmem:[%s501 + $0x190] sm:$0xff]
        %v1061 = vld [vmem:[%s501 + $0x198] sm:$0xff]
        %v1062 = vld [vmem:[%s501 + $0x1a0] sm:$0xff]
        %v1063 = vld [vmem:[%s501 + $0x1a8] sm:$0xff]
        %v1064 = vld [vmem:[%s501 + $0x1b0] sm:$0xff]
        %v1065 = vld [vmem:[%s501 + $0x1b8] sm:$0xff]
        %v1066 = vld [vmem:[%s501 + $0x1c0] sm:$0xff]
        %v1067 = vld [vmem:[%s501 + $0x1c8] sm:$0xff]
        %v1068 = vld [vmem:[%s501 + $0x1d0] sm:$0xff]
        %v1069 = vld [vmem:[%s501 + $0x1d8] sm:$0xff]
        %v1070 = vld [vmem:[%s501 + $0x1e0] sm:$0xff]
        %v1071 = vld [vmem:[%s501 + $0x1e8] sm:$0xff]
        %v1072 = vld [vmem:[%s501 + $0x1f0] sm:$0xff]
        %v1073 = vld [vmem:[%s501 + $0x1f8] sm:$0xff]
        %v1074 = vunpack.c.l.s8.bf16 %v1010
        %v1075 = vunpack.c.l.s8.bf16 %v1011
        %v1076 = vunpack.c.l.s8.bf16 %v1012
        %v1077 = vunpack.c.l.s8.bf16 %v1013
        %v1078 = vunpack.c.l.s8.bf16 %v1014
        %v1079 = vunpack.c.l.s8.bf16 %v1015
        %v1080 = vunpack.c.l.s8.bf16 %v1016
        %v1081 = vunpack.c.l.s8.bf16 %v1017
        %v1082 = vunpack.c.h.s8.bf16 %v1010
        %v1083 = vunpack.c.h.s8.bf16 %v1011
        %v1084 = vunpack.c.h.s8.bf16 %v1012
        %v1085 = vunpack.c.h.s8.bf16 %v1013
        %v1086 = vunpack.c.h.s8.bf16 %v1014
        %v1087 = vunpack.c.h.s8.bf16 %v1015
        %v1088 = vunpack.c.h.s8.bf16 %v1016
        %v1089 = vunpack.c.h.s8.bf16 %v1017
        %v1090 = vunpack.c.l.s8.bf16 %v1018
        %v1091 = vunpack.c.l.s8.bf16 %v1019
        %v1092 = vunpack.c.l.s8.bf16 %v1020
        %v1093 = vunpack.c.l.s8.bf16 %v1021
        %v1094 = vunpack.c.l.s8.bf16 %v1022
        %v1095 = vunpack.c.l.s8.bf16 %v1023
        %v1096 = vunpack.c.l.s8.bf16 %v1024
        %v1097 = vunpack.c.l.s8.bf16 %v1025
        %v1098 = vunpack.c.h.s8.bf16 %v1018
        %v1099 = vunpack.c.h.s8.bf16 %v1019
        %v1100 = vunpack.c.h.s8.bf16 %v1020
        %v1101 = vunpack.c.h.s8.bf16 %v1021
        %v1102 = vunpack.c.h.s8.bf16 %v1022
        %v1103 = vunpack.c.h.s8.bf16 %v1023
        %v1104 = vunpack.c.h.s8.bf16 %v1024
        %v1105 = vunpack.c.h.s8.bf16 %v1025
        %v1106 = vunpack.c.l.s8.bf16 %v1026
        %v1107 = vunpack.c.l.s8.bf16 %v1027
        %v1108 = vunpack.c.l.s8.bf16 %v1028
        %v1109 = vunpack.c.l.s8.bf16 %v1029
        %v1110 = vunpack.c.l.s8.bf16 %v1030
        %v1111 = vunpack.c.l.s8.bf16 %v1031
        %v1112 = vunpack.c.l.s8.bf16 %v1032
        %v1113 = vunpack.c.l.s8.bf16 %v1033
        %v1114 = vunpack.c.h.s8.bf16 %v1026
        %v1115 = vunpack.c.h.s8.bf16 %v1027
        %v1116 = vunpack.c.h.s8.bf16 %v1028
        %v1117 = vunpack.c.h.s8.bf16 %v1029
        %v1118 = vunpack.c.h.s8.bf16 %v1030
        %v1119 = vunpack.c.h.s8.bf16 %v1031
        %v1120 = vunpack.c.h.s8.bf16 %v1032
        %v1121 = vunpack.c.h.s8.bf16 %v1033
        %v1122 = vunpack.c.l.s8.bf16 %v1034
        %v1123 = vunpack.c.l.s8.bf16 %v1035
        %v1124 = vunpack.c.l.s8.bf16 %v1036
        %v1125 = vunpack.c.l.s8.bf16 %v1037
        %v1126 = vunpack.c.l.s8.bf16 %v1038
        %v1127 = vunpack.c.l.s8.bf16 %v1039
        %v1128 = vunpack.c.l.s8.bf16 %v1040
        %v1129 = vunpack.c.l.s8.bf16 %v1041
        %v1130 = vunpack.c.h.s8.bf16 %v1034
        %v1131 = vunpack.c.h.s8.bf16 %v1035
        %v1132 = vunpack.c.h.s8.bf16 %v1036
        %v1133 = vunpack.c.h.s8.bf16 %v1037
        %v1134 = vunpack.c.h.s8.bf16 %v1038
        %v1135 = vunpack.c.h.s8.bf16 %v1039
        %v1136 = vunpack.c.h.s8.bf16 %v1040
        %v1137 = vunpack.c.h.s8.bf16 %v1041
        %v1138 = vunpack.c.l.s8.bf16 %v1042
        %v1139 = vunpack.c.l.s8.bf16 %v1043
        %v1140 = vunpack.c.l.s8.bf16 %v1044
        %v1141 = vunpack.c.l.s8.bf16 %v1045
        %v1142 = vunpack.c.l.s8.bf16 %v1046
        %v1143 = vunpack.c.l.s8.bf16 %v1047
        %v1144 = vunpack.c.l.s8.bf16 %v1048
        %v1145 = vunpack.c.l.s8.bf16 %v1049
        %v1146 = vunpack.c.h.s8.bf16 %v1042
        %v1147 = vunpack.c.h.s8.bf16 %v1043
        %v1148 = vunpack.c.h.s8.bf16 %v1044
        %v1149 = vunpack.c.h.s8.bf16 %v1045
        %v1150 = vunpack.c.h.s8.bf16 %v1046
        %v1151 = vunpack.c.h.s8.bf16 %v1047
        %v1152 = vunpack.c.h.s8.bf16 %v1048
        %v1153 = vunpack.c.h.s8.bf16 %v1049
        %v1154 = vunpack.c.l.s8.bf16 %v1050
        %v1155 = vunpack.c.l.s8.bf16 %v1051
        %v1156 = vunpack.c.l.s8.bf16 %v1052
        %v1157 = vunpack.c.l.s8.bf16 %v1053
        %v1158 = vunpack.c.l.s8.bf16 %v1054
        %v1159 = vunpack.c.l.s8.bf16 %v1055
        %v1160 = vunpack.c.l.s8.bf16 %v1056
        %v1161 = vunpack.c.l.s8.bf16 %v1057
        %v1162 = vunpack.c.h.s8.bf16 %v1050
        %v1163 = vunpack.c.h.s8.bf16 %v1051
        %v1164 = vunpack.c.h.s8.bf16 %v1052
        %v1165 = vunpack.c.h.s8.bf16 %v1053
        %v1166 = vunpack.c.h.s8.bf16 %v1054
        %v1167 = vunpack.c.h.s8.bf16 %v1055
        %v1168 = vunpack.c.h.s8.bf16 %v1056
        %v1169 = vunpack.c.h.s8.bf16 %v1057
        %v1170 = vunpack.c.l.s8.bf16 %v1058
        %v1171 = vunpack.c.l.s8.bf16 %v1059
        %v1172 = vunpack.c.l.s8.bf16 %v1060
        %v1173 = vunpack.c.l.s8.bf16 %v1061
        %v1174 = vunpack.c.l.s8.bf16 %v1062
        %v1175 = vunpack.c.l.s8.bf16 %v1063
        %v1176 = vunpack.c.l.s8.bf16 %v1064
        %v1177 = vunpack.c.l.s8.bf16 %v1065
        %v1178 = vunpack.c.h.s8.bf16 %v1058
        %v1179 = vunpack.c.h.s8.bf16 %v1059
        %v1180 = vunpack.c.h.s8.bf16 %v1060
        %v1181 = vunpack.c.h.s8.bf16 %v1061
        %v1182 = vunpack.c.h.s8.bf16 %v1062
        %v1183 = vunpack.c.h.s8.bf16 %v1063
        %v1184 = vunpack.c.h.s8.bf16 %v1064
        %v1185 = vunpack.c.h.s8.bf16 %v1065
        %v1186 = vunpack.c.l.s8.bf16 %v1066
        %v1187 = vunpack.c.l.s8.bf16 %v1067
        %v1188 = vunpack.c.l.s8.bf16 %v1068
        %v1189 = vunpack.c.l.s8.bf16 %v1069
        %v1190 = vunpack.c.l.s8.bf16 %v1070
        %v1191 = vunpack.c.l.s8.bf16 %v1071
        %v1192 = vunpack.c.l.s8.bf16 %v1072
        %v1193 = vunpack.c.l.s8.bf16 %v1073
        %v1194 = vunpack.c.h.s8.bf16 %v1066
        %v1195 = vunpack.c.h.s8.bf16 %v1067
        %v1196 = vunpack.c.h.s8.bf16 %v1068
        %v1197 = vunpack.c.h.s8.bf16 %v1069
        %v1198 = vunpack.c.h.s8.bf16 %v1070
        %v1199 = vunpack.c.h.s8.bf16 %v1071
        %v1200 = vunpack.c.h.s8.bf16 %v1072
        %v1201 = vunpack.c.h.s8.bf16 %v1073
        %1202 = vmatprep.subr.bf16.mxu0 %v1131
        %1203 = vmatpush1.bf16.msra.mxu0 %v1130
        %1204 = vmatprep.subr.bf16.mxu0 %v1123
        %1205 = vmatpush1.bf16.msra.mxu0 %v1122
        %1206 = vmatprep.subr.bf16.mxu0 %v1115
        %1207 = vmatpush1.bf16.msra.mxu0 %v1114
        %1208 = vmatprep.subr.bf16.mxu0 %v1107
        %1209 = vmatpush1.bf16.msra.mxu0 %v1106
        %1210 = vmatprep.subr.bf16.mxu0 %v1099
        %1211 = vmatpush1.bf16.msra.mxu0 %v1098
        %1212 = vmatprep.subr.bf16.mxu0 %v1091
        %1213 = vmatpush1.bf16.msra.mxu0 %v1090
        %1214 = vmatprep.subr.bf16.mxu0 %v1083
        %1215 = vmatpush1.bf16.msra.mxu0 %v1082
        %1216 = vmatprep.subr.bf16.mxu0 %v1075
        %1217 = vmatpush1.bf16.msra.mxu0 %v1074
        %1218 = vmatprep.subr.bf16.mxu0 %v1195
        %1219 = vmatpush2.bf16.msra.mxu0 %v1194
        %1220 = vmatprep.subr.bf16.mxu0 %v1187
        %1221 = vmatpush2.bf16.msra.mxu0 %v1186
        %1222 = vmatprep.subr.bf16.mxu0 %v1179
        %1223 = vmatpush2.bf16.msra.mxu0 %v1178
        %1224 = vmatprep.subr.bf16.mxu0 %v1171
        %1225 = vmatpush2.bf16.msra.mxu0 %v1170
        %1226 = vmatprep.subr.bf16.mxu0 %v1163
        %1227 = vmatpush2.bf16.msra.mxu0 %v1162
        %1228 = vmatprep.subr.bf16.mxu0 %v1155
        %1229 = vmatpush2.bf16.msra.mxu0 %v1154
        %1230 = vmatprep.subr.bf16.mxu0 %v1147
        %1231 = vmatpush2.bf16.msra.mxu0 %v1146
        %1232 = vmatprep.subr.bf16.mxu0 %v1139
        %1233 = vmatpush2.bf16.msra.mxu0 %v1138
        %1234 = vmatprep.mubr.bf16.mxu0 %v1009
        %1235 = vmatmul.mubr.bf16.gmra.mxu0 %v1008
        %v1236 = vpop.f32.mrf.mxu0
        %v1237 = vadd.f32 0.0, %v1236
        %v1238 = vpop.f32.mrf.mxu0
        %v1239 = vadd.f32 0.0, %v1238
        %v1240 = vpop.f32.mrf.mxu0
        %v1241 = vpop.f32.mrf.mxu0
        %1242 = vdwg.mxu0
        %1243 = vmatprep.subr.bf16.mxu0 %v1133
        %1244 = vmatpush1.bf16.msra.mxu0 %v1132
        %1245 = vmatprep.subr.bf16.mxu0 %v1125
        %1246 = vmatpush1.bf16.msra.mxu0 %v1124
        %1247 = vmatprep.subr.bf16.mxu0 %v1117
        %1248 = vmatpush1.bf16.msra.mxu0 %v1116
        %1249 = vmatprep.subr.bf16.mxu0 %v1109
        %1250 = vmatpush1.bf16.msra.mxu0 %v1108
        %1251 = vmatprep.subr.bf16.mxu0 %v1101
        %1252 = vmatpush1.bf16.msra.mxu0 %v1100
        %1253 = vmatprep.subr.bf16.mxu0 %v1093
        %1254 = vmatpush1.bf16.msra.mxu0 %v1092
        %1255 = vmatprep.subr.bf16.mxu0 %v1085
        %1256 = vmatpush1.bf16.msra.mxu0 %v1084
        %1257 = vmatprep.subr.bf16.mxu0 %v1077
        %1258 = vmatpush1.bf16.msra.mxu0 %v1076
        %1259 = vmatprep.subr.bf16.mxu0 %v1197
        %1260 = vmatpush2.bf16.msra.mxu0 %v1196
        %1261 = vmatprep.subr.bf16.mxu0 %v1189
        %1262 = vmatpush2.bf16.msra.mxu0 %v1188
        %1263 = vmatprep.subr.bf16.mxu0 %v1181
        %1264 = vmatpush2.bf16.msra.mxu0 %v1180
        %1265 = vmatprep.subr.bf16.mxu0 %v1173
        %1266 = vmatpush2.bf16.msra.mxu0 %v1172
        %1267 = vmatprep.subr.bf16.mxu0 %v1165
        %1268 = vmatpush2.bf16.msra.mxu0 %v1164
        %1269 = vmatprep.subr.bf16.mxu0 %v1157
        %1270 = vmatpush2.bf16.msra.mxu0 %v1156
        %1271 = vmatprep.subr.bf16.mxu0 %v1149
        %1272 = vmatpush2.bf16.msra.mxu0 %v1148
        %1273 = vmatprep.subr.bf16.mxu0 %v1141
        %1274 = vmatpush2.bf16.msra.mxu0 %v1140
        %1275 = vmatprep.mubr.bf16.mxu0 %v1009
        %1276 = vmatmul.mubr.bf16.gmra.mxu0 %v1008
        %v1277 = vpop.f32.mrf.mxu0
        %v1278 = vadd.f32 0.0, %v1277
        %v1279 = vpop.f32.mrf.mxu0
        %v1280 = vadd.f32 0.0, %v1279
        %v1281 = vpop.f32.mrf.mxu0
        %v1282 = vpop.f32.mrf.mxu0
        %1283 = vdwg.mxu0
        %1284 = vmatprep.subr.bf16.mxu0 %v1135
        %1285 = vmatpush1.bf16.msra.mxu0 %v1134
        %1286 = vmatprep.subr.bf16.mxu0 %v1127
        %1287 = vmatpush1.bf16.msra.mxu0 %v1126
        %1288 = vmatprep.subr.bf16.mxu0 %v1119
        %1289 = vmatpush1.bf16.msra.mxu0 %v1118
        %1290 = vmatprep.subr.bf16.mxu0 %v1111
        %1291 = vmatpush1.bf16.msra.mxu0 %v1110
        %1292 = vmatprep.subr.bf16.mxu0 %v1103
        %1293 = vmatpush1.bf16.msra.mxu0 %v1102
        %1294 = vmatprep.subr.bf16.mxu0 %v1095
        %1295 = vmatpush1.bf16.msra.mxu0 %v1094
        %1296 = vmatprep.subr.bf16.mxu0 %v1087
        %1297 = vmatpush1.bf16.msra.mxu0 %v1086
        %1298 = vmatprep.subr.bf16.mxu0 %v1079
        %1299 = vmatpush1.bf16.msra.mxu0 %v1078
        %1300 = vmatprep.subr.bf16.mxu0 %v1199
        %1301 = vmatpush2.bf16.msra.mxu0 %v1198
        %1302 = vmatprep.subr.bf16.mxu0 %v1191
        %1303 = vmatpush2.bf16.msra.mxu0 %v1190
        %1304 = vmatprep.subr.bf16.mxu0 %v1183
        %1305 = vmatpush2.bf16.msra.mxu0 %v1182
        %1306 = vmatprep.subr.bf16.mxu0 %v1175
        %1307 = vmatpush2.bf16.msra.mxu0 %v1174
        %1308 = vmatprep.subr.bf16.mxu0 %v1167
        %1309 = vmatpush2.bf16.msra.mxu0 %v1166
        %1310 = vmatprep.subr.bf16.mxu0 %v1159
        %1311 = vmatpush2.bf16.msra.mxu0 %v1158
        %1312 = vmatprep.subr.bf16.mxu0 %v1151
        %1313 = vmatpush2.bf16.msra.mxu0 %v1150
        %1314 = vmatprep.subr.bf16.mxu0 %v1143
        %1315 = vmatpush2.bf16.msra.mxu0 %v1142
        %1316 = vmatprep.mubr.bf16.mxu0 %v1009
        %1317 = vmatmul.mubr.bf16.gmra.mxu0 %v1008
        %v1318 = vpop.f32.mrf.mxu0
        %v1319 = vadd.f32 0.0, %v1318
        %v1320 = vpop.f32.mrf.mxu0
        %v1321 = vadd.f32 0.0, %v1320
        %v1322 = vpop.f32.mrf.mxu0
        %v1323 = vpop.f32.mrf.mxu0
        %1324 = vdwg.mxu0
        %1325 = vmatprep.subr.bf16.mxu0 %v1137
        %1326 = vmatpush1.bf16.msra.mxu0 %v1136
        %1327 = vmatprep.subr.bf16.mxu0 %v1129
        %1328 = vmatpush1.bf16.msra.mxu0 %v1128
        %1329 = vmatprep.subr.bf16.mxu0 %v1121
        %1330 = vmatpush1.bf16.msra.mxu0 %v1120
        %1331 = vmatprep.subr.bf16.mxu0 %v1113
        %1332 = vmatpush1.bf16.msra.mxu0 %v1112
        %1333 = vmatprep.subr.bf16.mxu0 %v1105
        %1334 = vmatpush1.bf16.msra.mxu0 %v1104
        %1335 = vmatprep.subr.bf16.mxu0 %v1097
        %1336 = vmatpush1.bf16.msra.mxu0 %v1096
        %1337 = vmatprep.subr.bf16.mxu0 %v1089
        %1338 = vmatpush1.bf16.msra.mxu0 %v1088
        %1339 = vmatprep.subr.bf16.mxu0 %v1081
        %1340 = vmatpush1.bf16.msra.mxu0 %v1080
        %1341 = vmatprep.subr.bf16.mxu0 %v1201
        %1342 = vmatpush2.bf16.msra.mxu0 %v1200
        %1343 = vmatprep.subr.bf16.mxu0 %v1193
        %1344 = vmatpush2.bf16.msra.mxu0 %v1192
        %1345 = vmatprep.subr.bf16.mxu0 %v1185
        %1346 = vmatpush2.bf16.msra.mxu0 %v1184
        %1347 = vmatprep.subr.bf16.mxu0 %v1177
        %1348 = vmatpush2.bf16.msra.mxu0 %v1176
        %1349 = vmatprep.subr.bf16.mxu0 %v1169
        %1350 = vmatpush2.bf16.msra.mxu0 %v1168
        %1351 = vmatprep.subr.bf16.mxu0 %v1161
        %1352 = vmatpush2.bf16.msra.mxu0 %v1160
        %1353 = vmatprep.subr.bf16.mxu0 %v1153
        %1354 = vmatpush2.bf16.msra.mxu0 %v1152
        %1355 = vmatprep.subr.bf16.mxu0 %v1145
        %1356 = vmatpush2.bf16.msra.mxu0 %v1144
        %1357 = vmatprep.mubr.bf16.mxu0 %v1009
        %1358 = vmatmul.mubr.bf16.gmra.mxu0 %v1008
        %v1359 = vpop.f32.mrf.mxu0
        %v1360 = vadd.f32 0.0, %v1359
        %v1361 = vpop.f32.mrf.mxu0
        %v1362 = vadd.f32 0.0, %v1361
        %v1363 = vpop.f32.mrf.mxu0
        %v1364 = vpop.f32.mrf.mxu0
        %1365 = vdwg.mxu0
        %v1366 = vadd.f32 %v1000, %v1237
        %v1367 = vadd.f32 %v1001, %v1239
        %v1368 = vadd.f32 %v1002, %v1278
        %v1369 = vadd.f32 %v1003, %v1280
        %v1370 = vadd.f32 %v1004, %v1319
        %v1371 = vadd.f32 %v1005, %v1321
        %v1372 = vadd.f32 %v1006, %v1360
        %v1373 = vadd.f32 %v1007, %v1362
        %1374 = vst [vmem:[#allocation2] sm:$0xff] %v1366
        %1375 = vst [vmem:[#allocation2 + $0x8] sm:$0xff] %v1367
        %1376 = vst [vmem:[#allocation2 + $0x10] sm:$0xff] %v1368
        %1377 = vst [vmem:[#allocation2 + $0x18] sm:$0xff] %v1369
        %1378 = vst [vmem:[#allocation2 + $0x20] sm:$0xff] %v1370
        %1379 = vst [vmem:[#allocation2 + $0x28] sm:$0xff] %v1371
        %1380 = vst [vmem:[#allocation2 + $0x30] sm:$0xff] %v1372
        %1381 = vst [vmem:[#allocation2 + $0x38] sm:$0xff] %v1373
        %p1382 = scmp.eq.s32.totalorder %s33, 3
        // Predicated region
        $region93: #{time_freq_net_forward.1} parent=75 // pred_check
          %p1383 = pneg %p1382
        $region94: #{time_freq_net_forward.1} parent=75 // pred_check_branch
          %1385 = sbr.rel (%p1383) target = $region96
        $region95: #{time_freq_net_forward.1} parent=75 // pred_region
          %v1386 = vld [vmem:[#allocation2] sm:$0xff]
          %v1387 = vld [vmem:[#allocation2 + $0x8] sm:$0xff]
          %v1388 = vld [vmem:[#allocation2 + $0x10] sm:$0xff]
          %v1389 = vld [vmem:[#allocation2 + $0x18] sm:$0xff]
          %v1390 = vld [vmem:[#allocation2 + $0x20] sm:$0xff]
          %v1391 = vld [vmem:[#allocation2 + $0x28] sm:$0xff]
          %v1392 = vld [vmem:[#allocation2 + $0x30] sm:$0xff]
          %v1393 = vld [vmem:[#allocation2 + $0x38] sm:$0xff]
          %v1394 = vld [vmem:[%s6] sm:$0xff]
          %v1396 = vlaneseq
          %v1397 = vshrl.u32 %v1396, 7
          %v1398 = vsub.s32 0, %v1397
          %v1399 = vrot.slane %v1394, %v1398
          %v1400 = vlaneseq
          %v1401 = vshrl.u32 %v1400, 7
          %v1402 = vsub.s32 1, %v1401
          %v1403 = vrot.slane %v1394, %v1402
          %v1404 = vlaneseq
          %v1405 = vshrl.u32 %v1404, 7
          %v1406 = vsub.s32 2, %v1405
          %v1407 = vrot.slane %v1394, %v1406
          %v1408 = vlaneseq
          %v1409 = vshrl.u32 %v1408, 7
          %v1410 = vsub.s32 3, %v1409
          %v1411 = vrot.slane %v1394, %v1410
          %v1412 = vlaneseq
          %v1413 = vshrl.u32 %v1412, 7
          %v1414 = vsub.s32 4, %v1413
          %v1415 = vrot.slane %v1394, %v1414
          %v1416 = vlaneseq
          %v1417 = vshrl.u32 %v1416, 7
          %v1418 = vsub.s32 5, %v1417
          %v1419 = vrot.slane %v1394, %v1418
          %v1420 = vlaneseq
          %v1421 = vshrl.u32 %v1420, 7
          %v1422 = vsub.s32 6, %v1421
          %v1423 = vrot.slane %v1394, %v1422
          %v1424 = vlaneseq
          %v1425 = vshrl.u32 %v1424, 7
          %v1426 = vsub.s32 7, %v1425
          %v1427 = vrot.slane %v1394, %v1426
          %v1436 = vmul.f32 %v1386, %v1399
          %v1437 = vmul.f32 %v1387, %v1403
          %v1438 = vmul.f32 %v1388, %v1407
          %v1439 = vmul.f32 %v1389, %v1411
          %v1440 = vmul.f32 %v1390, %v1415
          %v1441 = vmul.f32 %v1391, %v1419
          %v1442 = vmul.f32 %v1392, %v1423
          %v1443 = vmul.f32 %v1393, %v1427
          %v1444 = vld [vmem:[%s7] sm:$0xff]
          %v1446 = vlaneseq
          %v1447 = vshrl.u32 %v1446, 7
          %v1448 = vsub.s32 0, %v1447
          %v1449 = vrot.slane %v1444, %v1448
          %v1450 = vlaneseq
          %v1451 = vshrl.u32 %v1450, 7
          %v1452 = vsub.s32 1, %v1451
          %v1453 = vrot.slane %v1444, %v1452
          %v1454 = vlaneseq
          %v1455 = vshrl.u32 %v1454, 7
          %v1456 = vsub.s32 2, %v1455
          %v1457 = vrot.slane %v1444, %v1456
          %v1458 = vlaneseq
          %v1459 = vshrl.u32 %v1458, 7
          %v1460 = vsub.s32 3, %v1459
          %v1461 = vrot.slane %v1444, %v1460
          %v1462 = vlaneseq
          %v1463 = vshrl.u32 %v1462, 7
          %v1464 = vsub.s32 4, %v1463
          %v1465 = vrot.slane %v1444, %v1464
          %v1466 = vlaneseq
          %v1467 = vshrl.u32 %v1466, 7
          %v1468 = vsub.s32 5, %v1467
          %v1469 = vrot.slane %v1444, %v1468
          %v1470 = vlaneseq
          %v1471 = vshrl.u32 %v1470, 7
          %v1472 = vsub.s32 6, %v1471
          %v1473 = vrot.slane %v1444, %v1472
          %v1474 = vlaneseq
          %v1475 = vshrl.u32 %v1474, 7
          %v1476 = vsub.s32 7, %v1475
          %v1477 = vrot.slane %v1444, %v1476
          %v1486 = vadd.f32 %v1436, %v1449
          %v1487 = vadd.f32 %v1437, %v1453
          %v1488 = vadd.f32 %v1438, %v1457
          %v1489 = vadd.f32 %v1439, %v1461
          %v1490 = vadd.f32 %v1440, %v1465
          %v1491 = vadd.f32 %v1441, %v1469
          %v1492 = vadd.f32 %v1442, %v1473
          %v1493 = vadd.f32 %v1443, %v1477
          %v1494 = vmax.f32 %v1486, 0.0
          %v1495 = vmax.f32 %v1487, 0.0
          %v1496 = vmax.f32 %v1488, 0.0
          %v1497 = vmax.f32 %v1489, 0.0
          %v1498 = vmax.f32 %v1490, 0.0
          %v1499 = vmax.f32 %v1491, 0.0
          %v1500 = vmax.f32 %v1492, 0.0
          %v1501 = vmax.f32 %v1493, 0.0
          %v1502 = vpack.c.bf16 %v1494, %v1494
          %v1503 = vpack.c.bf16 %v1495, %v1495
          %v1504 = vpack.c.bf16 %v1496, %v1496
          %v1505 = vpack.c.bf16 %v1497, %v1497
          %v1506 = vpack.c.bf16 %v1498, %v1498
          %v1507 = vpack.c.bf16 %v1499, %v1499
          %v1508 = vpack.c.bf16 %v1500, %v1500
          %v1509 = vpack.c.bf16 %v1501, %v1501
          %v1510 = vld [vmem:[#allocation8] sm:$0xff]
          %v1511 = vld [vmem:[#allocation8 + $0x8] sm:$0xff]
          %v1512 = vld [vmem:[#allocation8 + $0x10] sm:$0xff]
          %v1513 = vld [vmem:[#allocation8 + $0x18] sm:$0xff]
          %v1514 = vld [vmem:[#allocation8 + $0x20] sm:$0xff]
          %v1515 = vld [vmem:[#allocation8 + $0x28] sm:$0xff]
          %v1516 = vld [vmem:[#allocation8 + $0x30] sm:$0xff]
          %v1517 = vld [vmem:[#allocation8 + $0x38] sm:$0xff]
          %v1518 = vld [vmem:[#allocation8 + $0x40] sm:$0xff]
          %v1519 = vld [vmem:[#allocation8 + $0x48] sm:$0xff]
          %v1520 = vld [vmem:[#allocation8 + $0x50] sm:$0xff]
          %v1521 = vld [vmem:[#allocation8 + $0x58] sm:$0xff]
          %v1522 = vld [vmem:[#allocation8 + $0x60] sm:$0xff]
          %v1523 = vld [vmem:[#allocation8 + $0x68] sm:$0xff]
          %v1524 = vld [vmem:[#allocation8 + $0x70] sm:$0xff]
          %v1525 = vld [vmem:[#allocation8 + $0x78] sm:$0xff]
          %v1526 = vld [vmem:[#allocation8 + $0x80] sm:$0xff]
          %v1527 = vld [vmem:[#allocation8 + $0x88] sm:$0xff]
          %v1528 = vld [vmem:[#allocation8 + $0x90] sm:$0xff]
          %v1529 = vld [vmem:[#allocation8 + $0x98] sm:$0xff]
          %v1530 = vld [vmem:[#allocation8 + $0xa0] sm:$0xff]
          %v1531 = vld [vmem:[#allocation8 + $0xa8] sm:$0xff]
          %v1532 = vld [vmem:[#allocation8 + $0xb0] sm:$0xff]
          %v1533 = vld [vmem:[#allocation8 + $0xb8] sm:$0xff]
          %v1534 = vld [vmem:[#allocation8 + $0xc0] sm:$0xff]
          %v1535 = vld [vmem:[#allocation8 + $0xc8] sm:$0xff]
          %v1536 = vld [vmem:[#allocation8 + $0xd0] sm:$0xff]
          %v1537 = vld [vmem:[#allocation8 + $0xd8] sm:$0xff]
          %v1538 = vld [vmem:[#allocation8 + $0xe0] sm:$0xff]
          %v1539 = vld [vmem:[#allocation8 + $0xe8] sm:$0xff]
          %v1540 = vld [vmem:[#allocation8 + $0xf0] sm:$0xff]
          %v1541 = vld [vmem:[#allocation8 + $0xf8] sm:$0xff]
          %v1542 = vld [vmem:[#allocation8 + $0x100] sm:$0xff]
          %v1543 = vld [vmem:[#allocation8 + $0x108] sm:$0xff]
          %v1544 = vld [vmem:[#allocation8 + $0x110] sm:$0xff]
          %v1545 = vld [vmem:[#allocation8 + $0x118] sm:$0xff]
          %v1546 = vld [vmem:[#allocation8 + $0x120] sm:$0xff]
          %v1547 = vld [vmem:[#allocation8 + $0x128] sm:$0xff]
          %v1548 = vld [vmem:[#allocation8 + $0x130] sm:$0xff]
          %v1549 = vld [vmem:[#allocation8 + $0x138] sm:$0xff]
          %v1550 = vld [vmem:[#allocation8 + $0x140] sm:$0xff]
          %v1551 = vld [vmem:[#allocation8 + $0x148] sm:$0xff]
          %v1552 = vld [vmem:[#allocation8 + $0x150] sm:$0xff]
          %v1553 = vld [vmem:[#allocation8 + $0x158] sm:$0xff]
          %v1554 = vld [vmem:[#allocation8 + $0x160] sm:$0xff]
          %v1555 = vld [vmem:[#allocation8 + $0x168] sm:$0xff]
          %v1556 = vld [vmem:[#allocation8 + $0x170] sm:$0xff]
          %v1557 = vld [vmem:[#allocation8 + $0x178] sm:$0xff]
          %v1558 = vld [vmem:[#allocation8 + $0x180] sm:$0xff]
          %v1559 = vld [vmem:[#allocation8 + $0x188] sm:$0xff]
          %v1560 = vld [vmem:[#allocation8 + $0x190] sm:$0xff]
          %v1561 = vld [vmem:[#allocation8 + $0x198] sm:$0xff]
          %v1562 = vld [vmem:[#allocation8 + $0x1a0] sm:$0xff]
          %v1563 = vld [vmem:[#allocation8 + $0x1a8] sm:$0xff]
          %v1564 = vld [vmem:[#allocation8 + $0x1b0] sm:$0xff]
          %v1565 = vld [vmem:[#allocation8 + $0x1b8] sm:$0xff]
          %v1566 = vld [vmem:[#allocation8 + $0x1c0] sm:$0xff]
          %v1567 = vld [vmem:[#allocation8 + $0x1c8] sm:$0xff]
          %v1568 = vld [vmem:[#allocation8 + $0x1d0] sm:$0xff]
          %v1569 = vld [vmem:[#allocation8 + $0x1d8] sm:$0xff]
          %v1570 = vld [vmem:[#allocation8 + $0x1e0] sm:$0xff]
          %v1571 = vld [vmem:[#allocation8 + $0x1e8] sm:$0xff]
          %v1572 = vld [vmem:[#allocation8 + $0x1f0] sm:$0xff]
          %v1573 = vld [vmem:[#allocation8 + $0x1f8] sm:$0xff]
          %v1574 = vunpack.c.l.s8.bf16 %v1510
          %v1575 = vunpack.c.l.s8.bf16 %v1511
          %v1576 = vunpack.c.h.s8.bf16 %v1510
          %v1577 = vunpack.c.h.s8.bf16 %v1511
          %v1578 = vunpack.c.l.s8.bf16 %v1512
          %v1579 = vunpack.c.l.s8.bf16 %v1513
          %v1580 = vunpack.c.h.s8.bf16 %v1512
          %v1581 = vunpack.c.h.s8.bf16 %v1513
          %v1582 = vunpack.c.l.s8.bf16 %v1514
          %v1583 = vunpack.c.l.s8.bf16 %v1515
          %v1584 = vunpack.c.h.s8.bf16 %v1514
          %v1585 = vunpack.c.h.s8.bf16 %v1515
          %v1586 = vunpack.c.l.s8.bf16 %v1516
          %v1587 = vunpack.c.l.s8.bf16 %v1517
          %v1588 = vunpack.c.h.s8.bf16 %v1516
          %v1589 = vunpack.c.h.s8.bf16 %v1517
          %v1590 = vunpack.c.l.s8.bf16 %v1518
          %v1591 = vunpack.c.l.s8.bf16 %v1519
          %v1592 = vunpack.c.h.s8.bf16 %v1518
          %v1593 = vunpack.c.h.s8.bf16 %v1519
          %v1594 = vunpack.c.l.s8.bf16 %v1520
          %v1595 = vunpack.c.l.s8.bf16 %v1521
          %v1596 = vunpack.c.h.s8.bf16 %v1520
          %v1597 = vunpack.c.h.s8.bf16 %v1521
          %v1598 = vunpack.c.l.s8.bf16 %v1522
          %v1599 = vunpack.c.l.s8.bf16 %v1523
          %v1600 = vunpack.c.h.s8.bf16 %v1522
          %v1601 = vunpack.c.h.s8.bf16 %v1523
          %v1602 = vunpack.c.l.s8.bf16 %v1524
          %v1603 = vunpack.c.l.s8.bf16 %v1525
          %v1604 = vunpack.c.h.s8.bf16 %v1524
          %v1605 = vunpack.c.h.s8.bf16 %v1525
          %v1606 = vunpack.c.l.s8.bf16 %v1526
          %v1607 = vunpack.c.l.s8.bf16 %v1527
          %v1608 = vunpack.c.h.s8.bf16 %v1526
          %v1609 = vunpack.c.h.s8.bf16 %v1527
          %v1610 = vunpack.c.l.s8.bf16 %v1528
          %v1611 = vunpack.c.l.s8.bf16 %v1529
          %v1612 = vunpack.c.h.s8.bf16 %v1528
          %v1613 = vunpack.c.h.s8.bf16 %v1529
          %v1614 = vunpack.c.l.s8.bf16 %v1530
          %v1615 = vunpack.c.l.s8.bf16 %v1531
          %v1616 = vunpack.c.h.s8.bf16 %v1530
          %v1617 = vunpack.c.h.s8.bf16 %v1531
          %v1618 = vunpack.c.l.s8.bf16 %v1532
          %v1619 = vunpack.c.l.s8.bf16 %v1533
          %v1620 = vunpack.c.h.s8.bf16 %v1532
          %v1621 = vunpack.c.h.s8.bf16 %v1533
          %v1622 = vunpack.c.l.s8.bf16 %v1534
          %v1623 = vunpack.c.l.s8.bf16 %v1535
          %v1624 = vunpack.c.h.s8.bf16 %v1534
          %v1625 = vunpack.c.h.s8.bf16 %v1535
          %v1626 = vunpack.c.l.s8.bf16 %v1536
          %v1627 = vunpack.c.l.s8.bf16 %v1537
          %v1628 = vunpack.c.h.s8.bf16 %v1536
          %v1629 = vunpack.c.h.s8.bf16 %v1537
          %v1630 = vunpack.c.l.s8.bf16 %v1538
          %v1631 = vunpack.c.l.s8.bf16 %v1539
          %v1632 = vunpack.c.h.s8.bf16 %v1538
          %v1633 = vunpack.c.h.s8.bf16 %v1539
          %v1634 = vunpack.c.l.s8.bf16 %v1540
          %v1635 = vunpack.c.l.s8.bf16 %v1541
          %v1636 = vunpack.c.h.s8.bf16 %v1540
          %v1637 = vunpack.c.h.s8.bf16 %v1541
          %v1638 = vunpack.c.l.s8.bf16 %v1542
          %v1639 = vunpack.c.l.s8.bf16 %v1543
          %v1640 = vunpack.c.h.s8.bf16 %v1542
          %v1641 = vunpack.c.h.s8.bf16 %v1543
          %v1642 = vunpack.c.l.s8.bf16 %v1544
          %v1643 = vunpack.c.l.s8.bf16 %v1545
          %v1644 = vunpack.c.h.s8.bf16 %v1544
          %v1645 = vunpack.c.h.s8.bf16 %v1545
          %v1646 = vunpack.c.l.s8.bf16 %v1546
          %v1647 = vunpack.c.l.s8.bf16 %v1547
          %v1648 = vunpack.c.h.s8.bf16 %v1546
          %v1649 = vunpack.c.h.s8.bf16 %v1547
          %v1650 = vunpack.c.l.s8.bf16 %v1548
          %v1651 = vunpack.c.l.s8.bf16 %v1549
          %v1652 = vunpack.c.h.s8.bf16 %v1548
          %v1653 = vunpack.c.h.s8.bf16 %v1549
          %v1654 = vunpack.c.l.s8.bf16 %v1550
          %v1655 = vunpack.c.l.s8.bf16 %v1551
          %v1656 = vunpack.c.h.s8.bf16 %v1550
          %v1657 = vunpack.c.h.s8.bf16 %v1551
          %v1658 = vunpack.c.l.s8.bf16 %v1552
          %v1659 = vunpack.c.l.s8.bf16 %v1553
          %v1660 = vunpack.c.h.s8.bf16 %v1552
          %v1661 = vunpack.c.h.s8.bf16 %v1553
          %v1662 = vunpack.c.l.s8.bf16 %v1554
          %v1663 = vunpack.c.l.s8.bf16 %v1555
          %v1664 = vunpack.c.h.s8.bf16 %v1554
          %v1665 = vunpack.c.h.s8.bf16 %v1555
          %v1666 = vunpack.c.l.s8.bf16 %v1556
          %v1667 = vunpack.c.l.s8.bf16 %v1557
          %v1668 = vunpack.c.h.s8.bf16 %v1556
          %v1669 = vunpack.c.h.s8.bf16 %v1557
          %v1670 = vunpack.c.l.s8.bf16 %v1558
          %v1671 = vunpack.c.l.s8.bf16 %v1559
          %v1672 = vunpack.c.h.s8.bf16 %v1558
          %v1673 = vunpack.c.h.s8.bf16 %v1559
          %v1674 = vunpack.c.l.s8.bf16 %v1560
          %v1675 = vunpack.c.l.s8.bf16 %v1561
          %v1676 = vunpack.c.h.s8.bf16 %v1560
          %v1677 = vunpack.c.h.s8.bf16 %v1561
          %v1678 = vunpack.c.l.s8.bf16 %v1562
          %v1679 = vunpack.c.l.s8.bf16 %v1563
          %v1680 = vunpack.c.h.s8.bf16 %v1562
          %v1681 = vunpack.c.h.s8.bf16 %v1563
          %v1682 = vunpack.c.l.s8.bf16 %v1564
          %v1683 = vunpack.c.l.s8.bf16 %v1565
          %v1684 = vunpack.c.h.s8.bf16 %v1564
          %v1685 = vunpack.c.h.s8.bf16 %v1565
          %v1686 = vunpack.c.l.s8.bf16 %v1566
          %v1687 = vunpack.c.l.s8.bf16 %v1567
          %v1688 = vunpack.c.h.s8.bf16 %v1566
          %v1689 = vunpack.c.h.s8.bf16 %v1567
          %v1690 = vunpack.c.l.s8.bf16 %v1568
          %v1691 = vunpack.c.l.s8.bf16 %v1569
          %v1692 = vunpack.c.h.s8.bf16 %v1568
          %v1693 = vunpack.c.h.s8.bf16 %v1569
          %v1694 = vunpack.c.l.s8.bf16 %v1570
          %v1695 = vunpack.c.l.s8.bf16 %v1571
          %v1696 = vunpack.c.h.s8.bf16 %v1570
          %v1697 = vunpack.c.h.s8.bf16 %v1571
          %v1698 = vunpack.c.l.s8.bf16 %v1572
          %v1699 = vunpack.c.l.s8.bf16 %v1573
          %v1700 = vunpack.c.h.s8.bf16 %v1572
          %v1701 = vunpack.c.h.s8.bf16 %v1573
          %1702 = vmatprep.subr.bf16.mxu0 %v1589
          %1703 = vmatpush1.bf16.msra.mxu0 %v1588
          %1704 = vmatprep.subr.bf16.mxu0 %v1587
          %1705 = vmatpush1.bf16.msra.mxu0 %v1586
          %1706 = vmatprep.subr.bf16.mxu0 %v1585
          %1707 = vmatpush1.bf16.msra.mxu0 %v1584
          %1708 = vmatprep.subr.bf16.mxu0 %v1583
          %1709 = vmatpush1.bf16.msra.mxu0 %v1582
          %1710 = vmatprep.subr.bf16.mxu0 %v1581
          %1711 = vmatpush1.bf16.msra.mxu0 %v1580
          %1712 = vmatprep.subr.bf16.mxu0 %v1579
          %1713 = vmatpush1.bf16.msra.mxu0 %v1578
          %1714 = vmatprep.subr.bf16.mxu0 %v1577
          %1715 = vmatpush1.bf16.msra.mxu0 %v1576
          %1716 = vmatprep.subr.bf16.mxu0 %v1575
          %1717 = vmatpush1.bf16.msra.mxu0 %v1574
          %1718 = vmatprep.subr.bf16.mxu0 %v1605
          %1719 = vmatpush2.bf16.msra.mxu0 %v1604
          %1720 = vmatprep.subr.bf16.mxu0 %v1603
          %1721 = vmatpush2.bf16.msra.mxu0 %v1602
          %1722 = vmatprep.subr.bf16.mxu0 %v1601
          %1723 = vmatpush2.bf16.msra.mxu0 %v1600
          %1724 = vmatprep.subr.bf16.mxu0 %v1599
          %1725 = vmatpush2.bf16.msra.mxu0 %v1598
          %1726 = vmatprep.subr.bf16.mxu0 %v1597
          %1727 = vmatpush2.bf16.msra.mxu0 %v1596
          %1728 = vmatprep.subr.bf16.mxu0 %v1595
          %1729 = vmatpush2.bf16.msra.mxu0 %v1594
          %1730 = vmatprep.subr.bf16.mxu0 %v1593
          %1731 = vmatpush2.bf16.msra.mxu0 %v1592
          %1732 = vmatprep.subr.bf16.mxu0 %v1591
          %1733 = vmatpush2.bf16.msra.mxu0 %v1590
          %1734 = vmatprep.mubr.bf16.mxu0 %v1503
          %1735 = vmatmul.mubr.bf16.gmra.mxu0 %v1502
          %v1736 = vpop.f32.mrf.mxu0
          %v1737 = vadd.f32 0.0, %v1736
          %v1738 = vpop.f32.mrf.mxu0
          %v1739 = vadd.f32 0.0, %v1738
          %v1740 = vpop.f32.mrf.mxu0
          %v1741 = vpop.f32.mrf.mxu0
          %1742 = vdwg.mxu0
          %1743 = vmatprep.subr.bf16.mxu0 %v1621
          %1744 = vmatpush1.bf16.msra.mxu0 %v1620
          %1745 = vmatprep.subr.bf16.mxu0 %v1619
          %1746 = vmatpush1.bf16.msra.mxu0 %v1618
          %1747 = vmatprep.subr.bf16.mxu0 %v1617
          %1748 = vmatpush1.bf16.msra.mxu0 %v1616
          %1749 = vmatprep.subr.bf16.mxu0 %v1615
          %1750 = vmatpush1.bf16.msra.mxu0 %v1614
          %1751 = vmatprep.subr.bf16.mxu0 %v1613
          %1752 = vmatpush1.bf16.msra.mxu0 %v1612
          %1753 = vmatprep.subr.bf16.mxu0 %v1611
          %1754 = vmatpush1.bf16.msra.mxu0 %v1610
          %1755 = vmatprep.subr.bf16.mxu0 %v1609
          %1756 = vmatpush1.bf16.msra.mxu0 %v1608
          %1757 = vmatprep.subr.bf16.mxu0 %v1607
          %1758 = vmatpush1.bf16.msra.mxu0 %v1606
          %1759 = vmatprep.subr.bf16.mxu0 %v1637
          %1760 = vmatpush2.bf16.msra.mxu0 %v1636
          %1761 = vmatprep.subr.bf16.mxu0 %v1635
          %1762 = vmatpush2.bf16.msra.mxu0 %v1634
          %1763 = vmatprep.subr.bf16.mxu0 %v1633
          %1764 = vmatpush2.bf16.msra.mxu0 %v1632
          %1765 = vmatprep.subr.bf16.mxu0 %v1631
          %1766 = vmatpush2.bf16.msra.mxu0 %v1630
          %1767 = vmatprep.subr.bf16.mxu0 %v1629
          %1768 = vmatpush2.bf16.msra.mxu0 %v1628
          %1769 = vmatprep.subr.bf16.mxu0 %v1627
          %1770 = vmatpush2.bf16.msra.mxu0 %v1626
          %1771 = vmatprep.subr.bf16.mxu0 %v1625
          %1772 = vmatpush2.bf16.msra.mxu0 %v1624
          %1773 = vmatprep.subr.bf16.mxu0 %v1623
          %1774 = vmatpush2.bf16.msra.mxu0 %v1622
          %1775 = vmatprep.mubr.bf16.mxu0 %v1505
          %1776 = vmatmul.mubr.bf16.gmra.mxu0 %v1504
          %v1777 = vpop.f32.mrf.mxu0
          %v1778 = vadd.f32 %v1737, %v1777
          %v1779 = vpop.f32.mrf.mxu0
          %v1780 = vadd.f32 %v1739, %v1779
          %v1781 = vpop.f32.mrf.mxu0
          %v1782 = vpop.f32.mrf.mxu0
          %1783 = vdwg.mxu0
          %1784 = vmatprep.subr.bf16.mxu0 %v1653
          %1785 = vmatpush1.bf16.msra.mxu0 %v1652
          %1786 = vmatprep.subr.bf16.mxu0 %v1651
          %1787 = vmatpush1.bf16.msra.mxu0 %v1650
          %1788 = vmatprep.subr.bf16.mxu0 %v1649
          %1789 = vmatpush1.bf16.msra.mxu0 %v1648
          %1790 = vmatprep.subr.bf16.mxu0 %v1647
          %1791 = vmatpush1.bf16.msra.mxu0 %v1646
          %1792 = vmatprep.subr.bf16.mxu0 %v1645
          %1793 = vmatpush1.bf16.msra.mxu0 %v1644
          %1794 = vmatprep.subr.bf16.mxu0 %v1643
          %1795 = vmatpush1.bf16.msra.mxu0 %v1642
          %1796 = vmatprep.subr.bf16.mxu0 %v1641
          %1797 = vmatpush1.bf16.msra.mxu0 %v1640
          %1798 = vmatprep.subr.bf16.mxu0 %v1639
          %1799 = vmatpush1.bf16.msra.mxu0 %v1638
          %1800 = vmatprep.subr.bf16.mxu0 %v1669
          %1801 = vmatpush2.bf16.msra.mxu0 %v1668
          %1802 = vmatprep.subr.bf16.mxu0 %v1667
          %1803 = vmatpush2.bf16.msra.mxu0 %v1666
          %1804 = vmatprep.subr.bf16.mxu0 %v1665
          %1805 = vmatpush2.bf16.msra.mxu0 %v1664
          %1806 = vmatprep.subr.bf16.mxu0 %v1663
          %1807 = vmatpush2.bf16.msra.mxu0 %v1662
          %1808 = vmatprep.subr.bf16.mxu0 %v1661
          %1809 = vmatpush2.bf16.msra.mxu0 %v1660
          %1810 = vmatprep.subr.bf16.mxu0 %v1659
          %1811 = vmatpush2.bf16.msra.mxu0 %v1658
          %1812 = vmatprep.subr.bf16.mxu0 %v1657
          %1813 = vmatpush2.bf16.msra.mxu0 %v1656
          %1814 = vmatprep.subr.bf16.mxu0 %v1655
          %1815 = vmatpush2.bf16.msra.mxu0 %v1654
          %1816 = vmatprep.mubr.bf16.mxu0 %v1507
          %1817 = vmatmul.mubr.bf16.gmra.mxu0 %v1506
          %v1818 = vpop.f32.mrf.mxu0
          %v1819 = vadd.f32 %v1778, %v1818
          %v1820 = vpop.f32.mrf.mxu0
          %v1821 = vadd.f32 %v1780, %v1820
          %v1822 = vpop.f32.mrf.mxu0
          %v1823 = vpop.f32.mrf.mxu0
          %1824 = vdwg.mxu0
          %1825 = vmatprep.subr.bf16.mxu0 %v1685
          %1826 = vmatpush1.bf16.msra.mxu0 %v1684
          %1827 = vmatprep.subr.bf16.mxu0 %v1683
          %1828 = vmatpush1.bf16.msra.mxu0 %v1682
          %1829 = vmatprep.subr.bf16.mxu0 %v1681
          %1830 = vmatpush1.bf16.msra.mxu0 %v1680
          %1831 = vmatprep.subr.bf16.mxu0 %v1679
          %1832 = vmatpush1.bf16.msra.mxu0 %v1678
          %1833 = vmatprep.subr.bf16.mxu0 %v1677
          %1834 = vmatpush1.bf16.msra.mxu0 %v1676
          %1835 = vmatprep.subr.bf16.mxu0 %v1675
          %1836 = vmatpush1.bf16.msra.mxu0 %v1674
          %1837 = vmatprep.subr.bf16.mxu0 %v1673
          %1838 = vmatpush1.bf16.msra.mxu0 %v1672
          %1839 = vmatprep.subr.bf16.mxu0 %v1671
          %1840 = vmatpush1.bf16.msra.mxu0 %v1670
          %1841 = vmatprep.subr.bf16.mxu0 %v1701
          %1842 = vmatpush2.bf16.msra.mxu0 %v1700
          %1843 = vmatprep.subr.bf16.mxu0 %v1699
          %1844 = vmatpush2.bf16.msra.mxu0 %v1698
          %1845 = vmatprep.subr.bf16.mxu0 %v1697
          %1846 = vmatpush2.bf16.msra.mxu0 %v1696
          %1847 = vmatprep.subr.bf16.mxu0 %v1695
          %1848 = vmatpush2.bf16.msra.mxu0 %v1694
          %1849 = vmatprep.subr.bf16.mxu0 %v1693
          %1850 = vmatpush2.bf16.msra.mxu0 %v1692
          %1851 = vmatprep.subr.bf16.mxu0 %v1691
          %1852 = vmatpush2.bf16.msra.mxu0 %v1690
          %1853 = vmatprep.subr.bf16.mxu0 %v1689
          %1854 = vmatpush2.bf16.msra.mxu0 %v1688
          %1855 = vmatprep.subr.bf16.mxu0 %v1687
          %1856 = vmatpush2.bf16.msra.mxu0 %v1686
          %1857 = vmatprep.mubr.bf16.mxu0 %v1509
          %1858 = vmatmul.mubr.bf16.gmra.mxu0 %v1508
          %v1859 = vpop.f32.mrf.mxu0
          %v1860 = vadd.f32 %v1819, %v1859
          %v1861 = vpop.f32.mrf.mxu0
          %v1862 = vadd.f32 %v1821, %v1861
          %v1863 = vpop.f32.mrf.mxu0
          %v1864 = vpop.f32.mrf.mxu0
          %1865 = vdwg.mxu0
          %v1866 = vld [vmem:[%s9] sm:$0x3]
          %v1868 = vlaneseq
          %v1869 = vshrl.u32 %v1868, 7
          %v1870 = vsub.s32 0, %v1869
          %v1871 = vrot.slane %v1866, %v1870
          %v1872 = vlaneseq
          %v1873 = vshrl.u32 %v1872, 7
          %v1874 = vsub.s32 1, %v1873
          %v1875 = vrot.slane %v1866, %v1874
          %v1878 = vmul.f32 %v1860, %v1871
          %v1879 = vmul.f32 %v1862, %v1875
          %v1880 = vld [vmem:[%s10] sm:$0x3]
          %v1882 = vlaneseq
          %v1883 = vshrl.u32 %v1882, 7
          %v1884 = vsub.s32 0, %v1883
          %v1885 = vrot.slane %v1880, %v1884
          %v1886 = vlaneseq
          %v1887 = vshrl.u32 %v1886, 7
          %v1888 = vsub.s32 1, %v1887
          %v1889 = vrot.slane %v1880, %v1888
          %v1892 = vadd.f32 %v1878, %v1885
          %v1893 = vadd.f32 %v1879, %v1889
          %v1894 = vmax.f32 %v1892, 0.0
          %v1895 = vmax.f32 %v1893, 0.0
          %v1896 = vld [vmem:[%s11] sm:$0x3]
          %v1898 = vlaneseq
          %v1899 = vshrl.u32 %v1898, 7
          %v1900 = vsub.s32 0, %v1899
          %v1901 = vrot.slane %v1896, %v1900
          %v1902 = vlaneseq
          %v1903 = vshrl.u32 %v1902, 7
          %v1904 = vsub.s32 1, %v1903
          %v1905 = vrot.slane %v1896, %v1904
          %v1908 = vmul.f32 %v1894, %v1901
          %v1909 = vmul.f32 %v1895, %v1905
          %v1910 = vadd.f32 %v1908, %v1909
          %1911 = vadd.xlane.f32.xlu0 %v1910
          %v1912 = vpop.xlane.xlu0 %1911
          %v1913 = vld [vmem:[%s1] sm:$0x1]
          %v1914 = vld [vmem:[%s12] sm:$0x1]
          %v1915 = vmul.f32 %v1913, %v1914
          %vm1916 = vcmask 1040384
          %v1917 = vsel %vm1916, %v1915, 0.0
          %1918 = vadd.xlane.f32.xlu0 %v1917
          %v1919 = vpop.xlane.xlu0 %1918
          %v1920 = vlaneseq
          %v1921 = vshrl.u32 %v1920, 7
          %v1922 = vsub.s32 0, %v1921
          %v1923 = vrot.slane %v1919, %v1922
          %v1924 = vadd.f32 %v1912, %v1923
          %v1925 = vld [vmem:[#allocation3] sm:$0x1]
          %v1927 = vlaneseq
          %v1928 = vshrl.u32 %v1927, 7
          %v1929 = vsub.s32 0, %v1928
          %v1930 = vrot.slane %v1925, %v1929
          %v1932 = vadd.f32 %v1924, %v1930
          %v1933 = vmax.f32 %v1932, 0.0
          %vm1934 = vcmask 7168
          %1935 = vst.msk [vmem:[%s14] sm:$0xff] %vm1934, %v1933
        $region96: #{time_freq_net_forward.1} parent=75 // pred_fallthru
          _
        // Predicated region
        $region97: #{time_freq_net_forward.1} parent=75 // pred_check
          %p1936 = pneg %p360
        $region98: #{time_freq_net_forward.1} parent=75 // pred_check_branch
          %1938 = sbr.rel (%p1936) target = $region100
        $region99: #{time_freq_net_forward.1} parent=75 // pred_region
          _
        $region100: #{time_freq_net_forward.1} parent=75 // pred_fallthru
          _
        // Predicated region
        $region101: #{time_freq_net_forward.1} parent=75 // pred_check
          %p1939 = pneg %p360
        $region102: #{time_freq_net_forward.1} parent=75 // pred_check_branch
          %1941 = sbr.rel (%p1939) target = $region104
        $region103: #{time_freq_net_forward.1} parent=75 // pred_region
          _
        $region104: #{time_freq_net_forward.1} parent=75 // pred_fallthru
          _
      $region76: #{time_freq_net_forward.1} parent=5 // pred_fallthru
        _
      %p1942 = scmp.le.s32.totalorder 2, %s28
      // Predicated region
      $region105: #{time_freq_net_forward.1} parent=5 // pred_check
        %p1943 = pneg %p1942
      $region106: #{time_freq_net_forward.1} parent=5 // pred_check_branch
        %1945 = sbr.rel (%p1943) target = $region108
      $region107: #{time_freq_net_forward.1} parent=5 // pred_region
        %s1946 = ssub.s32 %s28, 2
      $region108: #{time_freq_net_forward.1} parent=5 // pred_fallthru
        _
    $region6: #{time_freq_net_forward.1} parent=1 // loop_footer
      %s32 = sadd.s32 1, %s28
    $region7: #{time_freq_net_forward.1} parent=1 // loop_footer_branch
      %27 = sbr.rel target = $region3
    $region8: #{time_freq_net_forward.1} parent=1 // loop_exit
      _
    %1947 = vsyncpa [#allocation5], 1
    %s1948 = scalar_lea.sflag [#allocation5], 1
    %1949 = vsyncpa %s1948, 1
    %1950 = vsyncpa [#allocation7], 1
    %s1951 = scalar_lea.sflag [#allocation7], 1
    %1952 = vsyncpa %s1951, 1

</llo_original>
